<compile_context>
chip_gen: v6e
topology: v6e:2x2x1
jax: 0.10.0
libtpu: 0.0.40
codegen_flags: <defaults>
</compile_context>

<pallas_src>
import functools

import jax
import jax.numpy as jnp
from jax.experimental import pallas as pl
from jax.experimental.pallas import tpu as pltpu


def _round_up(x: int, m: int) -> int:
    return (x + m - 1) // m * m


# --------------------------------------------------------------------------
# Kernel 1: batched input projection (parallel over time chunks)
#   gi = x @ W_ih + (b_ih + b_hh[r,z])      stored in f32
# --------------------------------------------------------------------------
def _in_proj_kernel(x_ref, w_ref, b_ref, gi_ref):
    x = x_ref[...].astype(w_ref.dtype)
    gi_ref[...] = (
        jnp.dot(x, w_ref[...], preferred_element_type=jnp.float32) + b_ref[...]
    )


# --------------------------------------------------------------------------
# Kernel 2: sequential GRU recurrence over time chunks
#   grid = (batch_blocks [parallel], time_chunks [arbitrary])
# --------------------------------------------------------------------------
def _gru_rec_kernel(gi_ref, h0_ref, whh_ref, bhn_ref, out_ref, h_scr):
    # Load the carried hidden state from h0 at the first time chunk.
    @pl.when(pl.program_id(1) == 0)
    def _():
        h_scr[...] = h0_ref[0].astype(jnp.float32)

    bb, hp = h_scr.shape
    t_block = out_ref.shape[0]

    # Hoisted out of the unrolled step loop (weights + broadcast bias).
    w = whh_ref[...]                                             # (Hp, 3Hp)
    b_hn = jnp.broadcast_to(bhn_ref[...], (bb, hp)).astype(jnp.float32)

    def step(tt, h):
        gi = gi_ref[tt]                                          # (Bb, 3Hp) f32
        gh = jnp.dot(h.astype(w.dtype), w,
                     preferred_element_type=jnp.float32)         # (Bb, 3Hp) f32
        r = jax.nn.sigmoid(gi[:, :hp] + gh[:, :hp])
        z = jax.nn.sigmoid(gi[:, hp:2 * hp] + gh[:, hp:2 * hp])
        n = jnp.tanh(gi[:, 2 * hp:] + r * (gh[:, 2 * hp:] + b_hn))
        h_new = (1.0 - z) * n + z * h
        out_ref[tt] = h_new.astype(out_ref.dtype)
        return h_new

    h_final = jax.lax.fori_loop(0, t_block, step, h_scr[...], unroll=True)
    h_scr[...] = h_final


# --------------------------------------------------------------------------
# Wrapper
# --------------------------------------------------------------------------
@functools.partial(
    jax.jit,
    static_argnames=("t_block", "b_block", "compute_dtype", "vmem_limit_bytes"),
)
def my_gru_pallas(x, h0, w_ih, w_hh, b_ih, b_hh, *,
                  t_block: int = 8,
                  b_block: int | None = None,
                  compute_dtype=jnp.float32,
                  vmem_limit_bytes: int | None = None):
    """x: (T, B, I), h0: (1, B, H) -> (output (T, B, H), h_last (B, H))."""
    T, B, I = x.shape
    H = h0.shape[-1]
    out_dtype = x.dtype

    if T == 0:  # degenerate case: no timesteps
        return jnp.zeros((0, B, H), out_dtype), h0[0].astype(out_dtype)

    # --- pad to hardware tiles -------------------------------------------
    Bp = _round_up(B, 8)                  # f32 sublane tile
    Hp = _round_up(H, 128)                # lane tile -> lane-dense out stores
    if b_block is None:
        b_block = Bp                      # single batch block (best on 1-TC);
                                          # pass smaller (mult. of 8) on v7x to
                                          # split batch across the 2 TCs.
    Bp = _round_up(Bp, b_block)
    Tp = _round_up(T, t_block)

    def pad_gate_cols(w):                 # (..., 3H) -> (..., 3Hp), per gate
        lead = w.shape[:-1]
        w3 = w.reshape(*lead, 3, H)
        w3 = jnp.pad(w3, [(0, 0)] * len(lead) + [(0, 0), (0, Hp - H)])
        return w3.reshape(*lead, 3 * Hp)

    w_ih_p = pad_gate_cols(w_ih).astype(compute_dtype)              # (I, 3Hp)
    w_hh_p = pad_gate_cols(w_hh)                                    # (H, 3Hp)
    w_hh_p = jnp.pad(w_hh_p, ((0, Hp - H), (0, 0))).astype(compute_dtype)

    b_ih3 = jnp.pad(b_ih.reshape(3, H), ((0, 0), (0, Hp - H)))
    b_hh3 = jnp.pad(b_hh.reshape(3, H), ((0, 0), (0, Hp - H)))
    gate_mask = jnp.array([1.0, 1.0, 0.0], b_hh3.dtype)[:, None]
    # Fold b_ih (all gates) + b_hh (r,z gates) into the hoisted projection.
    b_comb = (b_ih3 + b_hh3 * gate_mask).reshape(1, 3 * Hp).astype(jnp.float32)
    b_hn = b_hh3[2:3, :].astype(jnp.float32)                        # (1, Hp)

    x_pad = jnp.pad(x, ((0, Tp - T), (0, Bp - B), (0, 0))).astype(compute_dtype)
    h0_pad = jnp.pad(h0, ((0, 0), (0, Bp - B), (0, Hp - H))).astype(jnp.float32)

    cp_kwargs = {}
    if vmem_limit_bytes is not None:      # raise scoped VMEM (e.g. big H on v6e)
        cp_kwargs["vmem_limit_bytes"] = vmem_limit_bytes

    # --- phase 1: hoisted input projection (parallel over time chunks) ----
    x2 = x_pad.reshape(Tp * Bp, I)
    rows_blk = t_block * Bp
    gi2 = pl.pallas_call(
        _in_proj_kernel,
        out_shape=jax.ShapeDtypeStruct((Tp * Bp, 3 * Hp), jnp.float32),
        grid_spec=pltpu.PrefetchScalarGridSpec(
            num_scalar_prefetch=0,
            grid=(Tp // t_block,),
            in_specs=[
                pl.BlockSpec((rows_blk, I), lambda r: (r, 0)),
                pl.BlockSpec((I, 3 * Hp), lambda r: (0, 0)),
                pl.BlockSpec((1, 3 * Hp), lambda r: (0, 0)),
            ],
            out_specs=pl.BlockSpec((rows_blk, 3 * Hp), lambda r: (r, 0)),
        ),
        compiler_params=pltpu.CompilerParams(
            dimension_semantics=("parallel",), **cp_kwargs),
    )(x2, w_ih_p, b_comb)
    gi = gi2.reshape(Tp, Bp, 3 * Hp)

    # --- phase 2: sequential recurrence (chunked timesteps) ---------------
    # NOTE: for very large H on v7x (64 MiB VMEM/TC), consider
    # pipeline_mode=pl.Buffered(1) on the constant weight spec / bf16 weights.
    out_pad = pl.pallas_call(
        _gru_rec_kernel,
        out_shape=jax.ShapeDtypeStruct((Tp, Bp, Hp), out_dtype),
        grid_spec=pltpu.PrefetchScalarGridSpec(
            num_scalar_prefetch=0,
            grid=(Bp // b_block, Tp // t_block),
            in_specs=[
                pl.BlockSpec((t_block, b_block, 3 * Hp), lambda b, t: (t, b, 0)),
                pl.BlockSpec((1, b_block, Hp), lambda b, t: (0, b, 0)),
                pl.BlockSpec((Hp, 3 * Hp), lambda b, t: (0, 0)),
                pl.BlockSpec((1, Hp), lambda b, t: (0, 0)),
            ],
            out_specs=pl.BlockSpec((t_block, b_block, Hp),
                                   lambda b, t: (t, b, 0)),
            scratch_shapes=[pltpu.VMEM((b_block, Hp), jnp.float32)],
        ),
        compiler_params=pltpu.CompilerParams(
            dimension_semantics=("parallel", "arbitrary"), **cp_kwargs),
    )(gi, h0_pad, w_hh_p, b_hn)

    out = out_pad[:T, :B, :H]
    h_last = out[T - 1]          # == final hidden state (torch returns hx)
    return out, h_last


# --------------------------------------------------------------------------
# Pure-JAX reference (torch.nn.GRUCell semantics, f32)
# --------------------------------------------------------------------------
def my_gru_ref(x, h0, w_ih, w_hh, b_ih, b_hh):
    H = h0.shape[-1]
    h = h0[0]
    outs = []
    for t in range(x.shape[0]):
        gi = x[t] @ w_ih + b_ih
        gh = h @ w_hh + b_hh
        i_r, i_z, i_n = gi[:, :H], gi[:, H:2 * H], gi[:, 2 * H:]
        h_r, h_z, h_n = gh[:, :H], gh[:, H:2 * H], gh[:, 2 * H:]
        r = jax.nn.sigmoid(i_r + h_r)
        z = jax.nn.sigmoid(i_z + h_z)
        n = jnp.tanh(i_n + r * h_n)
        h = (1.0 - z) * n + z * h
        outs.append(h)
    return jnp.stack(outs), h


if __name__ == "__main__":
    # Small shapes consistent with the module's forward:
    #   x: (seq_len, batch, input_size), h0: (num_layers=1, batch, hidden_size)
    T, B, I, H = 8, 2, 16, 32

    key = jax.random.PRNGKey(0)
    kx, kh, k1, k2, k3, k4 = jax.random.split(key, 6)

    x = jax.random.normal(kx, (T, B, I), dtype=jnp.float32)
    h0 = jax.random.normal(kh, (1, B, H), dtype=jnp.float32)

    bound = 1.0 / jnp.sqrt(jnp.float32(H))
    w_ih = jax.random.uniform(k1, (I, 3 * H), jnp.float32, -bound, bound)
    w_hh = jax.random.uniform(k2, (H, 3 * H), jnp.float32, -bound, bound)
    b_ih = jax.random.uniform(k3, (3 * H,), jnp.float32, -bound, bound)
    b_hh = jax.random.uniform(k4, (3 * H,), jnp.float32, -bound, bound)

    out_ref, h_ref = my_gru_ref(x, h0, w_ih, w_hh, b_ih, b_hh)

    # f32 compute path (strict check).
    out, h_last = my_gru_pallas(x, h0, w_ih, w_hh, b_ih, b_hh,
                                t_block=8, compute_dtype=jnp.float32)
    out = jax.block_until_ready(out)
    h_last = jax.block_until_ready(h_last)
    assert out.shape == (T, B, H) and h_last.shape == (B, H)
    assert jnp.allclose(out, out_ref, atol=1e-4, rtol=1e-4)
    assert jnp.allclose(h_last, h_ref, atol=1e-4, rtol=1e-4)

    # bf16 MXU path (f32 carry/accumulation) -- looser tolerance.
    out_bf, h_bf = my_gru_pallas(x, h0, w_ih, w_hh, b_ih, b_hh,
                                 t_block=8, compute_dtype=jnp.bfloat16)
    out_bf = jax.block_until_ready(out_bf)
    h_bf = jax.block_until_ready(h_bf)
    assert out_bf.shape == (T, B, H) and h_bf.shape == (B, H)
    assert jnp.allclose(out_bf, out_ref, atol=1e-1)
    assert jnp.allclose(h_bf, h_ref, atol=1e-1)

    print("KERNEL_OK")
</pallas_src>

<mosaic_0001>
module attributes {stable_mosaic.version = 11 : i64} {
  func.func @_in_proj_kernel(%arg0: i32, %arg1: memref<64x16xf32, #tpu.memory_space<vmem>>, %arg2: memref<16x384xf32, #tpu.memory_space<vmem>>, %arg3: memref<1x384xf32, #tpu.memory_space<vmem>>, %arg4: memref<64x384xf32, #tpu.memory_space<vmem>>) attributes {dimension_semantics = [#tpu.dimension_semantics<parallel>], iteration_bounds = array<i64: 1>, scalar_prefetch = 0 : i64, scratch_operands = 0 : i64, tpu.core_type = #tpu.core_type<tc>, window_params = [{transform_indices = @transform_0, window_bounds = array<i64: 64, 16>}, {pipeline_mode = #tpu.pipeline_mode<synchronous>, transform_indices = @transform_1, window_bounds = array<i64: 16, 384>}, {pipeline_mode = #tpu.pipeline_mode<synchronous>, transform_indices = @transform_2, window_bounds = array<i64: 1, 384>}, {transform_indices = @transform_3, window_bounds = array<i64: 64, 384>}]} {
    %c0 = arith.constant 0 : index
    %c0_0 = arith.constant 0 : index
    %0 = vector.load %arg1[%c0, %c0_0] : memref<64x16xf32, #tpu.memory_space<vmem>>, vector<64x16xf32>
    %c0_1 = arith.constant 0 : index
    %c0_2 = arith.constant 0 : index
    %1 = vector.load %arg2[%c0_1, %c0_2] : memref<16x384xf32, #tpu.memory_space<vmem>>, vector<16x384xf32>
    %cst = arith.constant dense<0.000000e+00> : vector<64x384xf32>
    %2 = tpu.matmul %0, %1, %cst {dimension_numbers = #tpu.dot_dimension_numbers<[1], [0], [0], [1], [0, 0, 1, 1], [], []>} : vector<64x16xf32>, vector<16x384xf32>, vector<64x384xf32> -> vector<64x384xf32>
    %c0_3 = arith.constant 0 : index
    %c0_4 = arith.constant 0 : index
    %3 = vector.load %arg3[%c0_3, %c0_4] : memref<1x384xf32, #tpu.memory_space<vmem>>, vector<1x384xf32>
    %4 = vector.broadcast %3 : vector<1x384xf32> to vector<64x384xf32>
    %5 = arith.addf %2, %4 : vector<64x384xf32>
    %c0_5 = arith.constant 0 : index
    %c0_6 = arith.constant 0 : index
    %6 = vector.load %arg4[%c0_5, %c0_6] : memref<64x384xf32, #tpu.memory_space<vmem>>, vector<64x384xf32>
    tpu.vector_store %arg4[%c0_5, %c0_6], %5 {strides = array<i32>} : memref<64x384xf32, #tpu.memory_space<vmem>>, vector<64x384xf32>,
    return
  }
  func.func @transform_0(%arg0: i32) -> (i32, i32) {
    %c0_i32 = arith.constant 0 : i32
    %c0_i32_0 = arith.constant 0 : i32
    return %arg0, %c0_i32 : i32, i32
  }
  func.func @transform_1(%arg0: i32) -> (i32, i32) {
    %c0_i32 = arith.constant 0 : i32
    %c0_i32_0 = arith.constant 0 : i32
    %c0_i32_1 = arith.constant 0 : i32
    return %c0_i32, %c0_i32_0 : i32, i32
  }
  func.func @transform_2(%arg0: i32) -> (i32, i32) {
    %c0_i32 = arith.constant 0 : i32
    %c0_i32_0 = arith.constant 0 : i32
    %c0_i32_1 = arith.constant 0 : i32
    return %c0_i32, %c0_i32_0 : i32, i32
  }
  func.func @transform_3(%arg0: i32) -> (i32, i32) {
    %c0_i32 = arith.constant 0 : i32
    %c0_i32_0 = arith.constant 0 : i32
    return %arg0, %c0_i32 : i32, i32
  }
}

module attributes {stable_mosaic.version = 11 : i64} {
  func.func @_gru_rec_kernel(%arg0: i32, %arg1: i32, %arg2: memref<8x8x384xf32, #tpu.memory_space<vmem>>, %arg3: memref<1x8x128xf32, #tpu.memory_space<vmem>>, %arg4: memref<128x384xf32, #tpu.memory_space<vmem>>, %arg5: memref<1x128xf32, #tpu.memory_space<vmem>>, %arg6: memref<8x8x128xf32, #tpu.memory_space<vmem>>, %arg7: memref<8x128xf32, #tpu.memory_space<vmem>>) attributes {dimension_semantics = [#tpu.dimension_semantics<parallel>, #tpu.dimension_semantics<arbitrary>], iteration_bounds = array<i64: 1, 1>, scalar_prefetch = 0 : i64, scratch_operands = 1 : i64, tpu.core_type = #tpu.core_type<tc>, window_params = [{transform_indices = @transform_0, window_bounds = array<i64: 8, 8, 384>}, {transform_indices = @transform_1, window_bounds = array<i64: 1, 8, 128>}, {pipeline_mode = #tpu.pipeline_mode<synchronous>, transform_indices = @transform_2, window_bounds = array<i64: 128, 384>}, {pipeline_mode = #tpu.pipeline_mode<synchronous>, transform_indices = @transform_3, window_bounds = array<i64: 1, 128>}, {transform_indices = @transform_4, window_bounds = array<i64: 8, 8, 128>}]} {
    %c0_i32 = arith.constant 0 : i32
    %0 = arith.cmpi eq, %arg1, %c0_i32 : i32
    %1 = arith.extui %0 : i1 to i32
    %c0_i32_0 = arith.constant 0 : i32
    %2 = arith.cmpi ne, %1, %c0_i32_0 : i32
    scf.if %2 {
      %c0_72 = arith.constant 0 : index
      %c0_73 = arith.constant 0 : index
      %c0_74 = arith.constant 0 : index
      %289 = vector.load %arg3[%c0_72, %c0_73, %c0_74] : memref<1x8x128xf32, #tpu.memory_space<vmem>>, vector<1x8x128xf32>
      %290 = vector.shape_cast %289 : vector<1x8x128xf32> to vector<8x128xf32>
      %c0_75 = arith.constant 0 : index
      %c0_76 = arith.constant 0 : index
      %291 = vector.load %arg7[%c0_75, %c0_76] : memref<8x128xf32, #tpu.memory_space<vmem>>, vector<8x128xf32>
      tpu.vector_store %arg7[%c0_75, %c0_76], %290 {strides = array<i32>} : memref<8x128xf32, #tpu.memory_space<vmem>>, vector<8x128xf32>,
    } else {
    }
    %c0 = arith.constant 0 : index
    %c0_1 = arith.constant 0 : index
    %3 = vector.load %arg4[%c0, %c0_1] : memref<128x384xf32, #tpu.memory_space<vmem>>, vector<128x384xf32>
    %c0_2 = arith.constant 0 : index
    %c0_3 = arith.constant 0 : index
    %4 = vector.load %arg5[%c0_2, %c0_3] : memref<1x128xf32, #tpu.memory_space<vmem>>, vector<1x128xf32>
    %5 = vector.shape_cast %4 : vector<1x128xf32> to vector<1x128xf32>
    %6 = vector.broadcast %5 : vector<1x128xf32> to vector<8x128xf32>
    %c0_4 = arith.constant 0 : index
    %c0_5 = arith.constant 0 : index
    %7 = vector.load %arg7[%c0_4, %c0_5] : memref<8x128xf32, #tpu.memory_space<vmem>>, vector<8x128xf32>
    %c0_i32_6 = arith.constant 0 : i32
    %8 = arith.index_cast %c0_i32_6 : i32 to index
    %c0_7 = arith.constant 0 : index
    %c0_8 = arith.constant 0 : index
    %9 = vector.load %arg2[%8, %c0_7, %c0_8] : memref<8x8x384xf32, #tpu.memory_space<vmem>>, vector<1x8x384xf32>
    %10 = vector.shape_cast %9 : vector<1x8x384xf32> to vector<8x384xf32>
    %cst = arith.constant dense<0.000000e+00> : vector<8x384xf32>
    %11 = tpu.matmul %7, %3, %cst {dimension_numbers = #tpu.dot_dimension_numbers<[1], [0], [0], [1], [0, 0, 1, 1], [], []>} : vector<8x128xf32>, vector<128x384xf32>, vector<8x384xf32> -> vector<8x384xf32>
    %12 = vector.extract_strided_slice %10 {offsets = [0, 0], sizes = [8, 128], strides = [1, 1]} : vector<8x384xf32> to vector<8x128xf32>
    %13 = vector.extract_strided_slice %11 {offsets = [0, 0], sizes = [8, 128], strides = [1, 1]} : vector<8x384xf32> to vector<8x128xf32>
    %14 = arith.addf %12, %13 : vector<8x128xf32>
    %15 = arith.negf %14 : vector<8x128xf32>
    %16 = math.exp %15 : vector<8x128xf32>
    %cst_9 = arith.constant 1.000000e+00 : f32
    %17 = vector.broadcast %cst_9 : f32 to vector<8x128xf32>
    %18 = arith.addf %17, %16 : vector<8x128xf32>
    %19 = arith.divf %17, %18 : vector<8x128xf32>
    %20 = vector.extract_strided_slice %10 {offsets = [0, 128], sizes = [8, 128], strides = [1, 1]} : vector<8x384xf32> to vector<8x128xf32>
    %21 = vector.extract_strided_slice %11 {offsets = [0, 128], sizes = [8, 128], strides = [1, 1]} : vector<8x384xf32> to vector<8x128xf32>
    %22 = arith.addf %20, %21 : vector<8x128xf32>
    %23 = arith.negf %22 : vector<8x128xf32>
    %24 = math.exp %23 : vector<8x128xf32>
    %cst_10 = arith.constant 1.000000e+00 : f32
    %25 = vector.broadcast %cst_10 : f32 to vector<8x128xf32>
    %26 = arith.addf %25, %24 : vector<8x128xf32>
    %27 = arith.divf %25, %26 : vector<8x128xf32>
    %28 = vector.extract_strided_slice %10 {offsets = [0, 256], sizes = [8, 128], strides = [1, 1]} : vector<8x384xf32> to vector<8x128xf32>
    %29 = vector.extract_strided_slice %11 {offsets = [0, 256], sizes = [8, 128], strides = [1, 1]} : vector<8x384xf32> to vector<8x128xf32>
    %30 = arith.addf %29, %6 : vector<8x128xf32>
    %31 = arith.mulf %19, %30 : vector<8x128xf32>
    %32 = arith.addf %28, %31 : vector<8x128xf32>
    %33 = math.tanh %32 : vector<8x128xf32>
    %cst_11 = arith.constant 1.000000e+00 : f32
    %34 = vector.broadcast %cst_11 : f32 to vector<8x128xf32>
    %35 = arith.subf %34, %27 : vector<8x128xf32>
    %36 = arith.mulf %35, %33 : vector<8x128xf32>
    %37 = arith.mulf %27, %7 : vector<8x128xf32>
    %38 = arith.addf %36, %37 : vector<8x128xf32>
    %39 = arith.index_cast %c0_i32_6 : i32 to index
    %c0_12 = arith.constant 0 : index
    %c0_13 = arith.constant 0 : index
    %40 = vector.load %arg6[%39, %c0_12, %c0_13] : memref<8x8x128xf32, #tpu.memory_space<vmem>>, vector<1x8x128xf32>
    %41 = vector.shape_cast %40 : vector<1x8x128xf32> to vector<8x128xf32>
    %42 = vector.shape_cast %38 : vector<8x128xf32> to vector<1x8x128xf32>
    tpu.vector_store %arg6[%39, %c0_12, %c0_13], %42 {strides = array<i32>} : memref<8x8x128xf32, #tpu.memory_space<vmem>>, vector<1x8x128xf32>,
    %c1_i32 = arith.constant 1 : i32
    %43 = arith.index_cast %c1_i32 : i32 to index
    %c0_14 = arith.constant 0 : index
    %c0_15 = arith.constant 0 : index
    %44 = vector.load %arg2[%43, %c0_14, %c0_15] : memref<8x8x384xf32, #tpu.memory_space<vmem>>, vector<1x8x384xf32>
    %45 = vector.shape_cast %44 : vector<1x8x384xf32> to vector<8x384xf32>
    %cst_16 = arith.constant dense<0.000000e+00> : vector<8x384xf32>
    %46 = tpu.matmul %38, %3, %cst_16 {dimension_numbers = #tpu.dot_dimension_numbers<[1], [0], [0], [1], [0, 0, 1, 1], [], []>} : vector<8x128xf32>, vector<128x384xf32>, vector<8x384xf32> -> vector<8x384xf32>
    %47 = vector.extract_strided_slice %45 {offsets = [0, 0], sizes = [8, 128], strides = [1, 1]} : vector<8x384xf32> to vector<8x128xf32>
    %48 = vector.extract_strided_slice %46 {offsets = [0, 0], sizes = [8, 128], strides = [1, 1]} : vector<8x384xf32> to vector<8x128xf32>
    %49 = arith.addf %47, %48 : vector<8x128xf32>
    %50 = arith.negf %49 : vector<8x128xf32>
    %51 = math.exp %50 : vector<8x128xf32>
    %cst_17 = arith.constant 1.000000e+00 : f32
    %52 = vector.broadcast %cst_17 : f32 to vector<8x128xf32>
    %53 = arith.addf %52, %51 : vector<8x128xf32>
    %54 = arith.divf %52, %53 : vector<8x128xf32>
    %55 = vector.extract_strided_slice %45 {offsets = [0, 128], sizes = [8, 128], strides = [1, 1]} : vector<8x384xf32> to vector<8x128xf32>
    %56 = vector.extract_strided_slice %46 {offsets = [0, 128], sizes = [8, 128], strides = [1, 1]} : vector<8x384xf32> to vector<8x128xf32>
    %57 = arith.addf %55, %56 : vector<8x128xf32>
    %58 = arith.negf %57 : vector<8x128xf32>
    %59 = math.exp %58 : vector<8x128xf32>
    %cst_18 = arith.constant 1.000000e+00 : f32
    %60 = vector.broadcast %cst_18 : f32 to vector<8x128xf32>
    %61 = arith.addf %60, %59 : vector<8x128xf32>
    %62 = arith.divf %60, %61 : vector<8x128xf32>
    %63 = vector.extract_strided_slice %45 {offsets = [0, 256], sizes = [8, 128], strides = [1, 1]} : vector<8x384xf32> to vector<8x128xf32>
    %64 = vector.extract_strided_slice %46 {offsets = [0, 256], sizes = [8, 128], strides = [1, 1]} : vector<8x384xf32> to vector<8x128xf32>
    %65 = arith.addf %64, %6 : vector<8x128xf32>
    %66 = arith.mulf %54, %65 : vector<8x128xf32>
    %67 = arith.addf %63, %66 : vector<8x128xf32>
    %68 = math.tanh %67 : vector<8x128xf32>
    %cst_19 = arith.constant 1.000000e+00 : f32
    %69 = vector.broadcast %cst_19 : f32 to vector<8x128xf32>
    %70 = arith.subf %69, %62 : vector<8x128xf32>
    %71 = arith.mulf %70, %68 : vector<8x128xf32>
    %72 = arith.mulf %62, %38 : vector<8x128xf32>
    %73 = arith.addf %71, %72 : vector<8x128xf32>
    %74 = arith.index_cast %c1_i32 : i32 to index
    %c0_20 = arith.constant 0 : index
    %c0_21 = arith.constant 0 : index
    %75 = vector.load %arg6[%74, %c0_20, %c0_21] : memref<8x8x128xf32, #tpu.memory_space<vmem>>, vector<1x8x128xf32>
    %76 = vector.shape_cast %75 : vector<1x8x128xf32> to vector<8x128xf32>
    %77 = vector.shape_cast %73 : vector<8x128xf32> to vector<1x8x128xf32>
    tpu.vector_store %arg6[%74, %c0_20, %c0_21], %77 {strides = array<i32>} : memref<8x8x128xf32, #tpu.memory_space<vmem>>, vector<1x8x128xf32>,
    %c2_i32 = arith.constant 2 : i32
    %78 = arith.index_cast %c2_i32 : i32 to index
    %c0_22 = arith.constant 0 : index
    %c0_23 = arith.constant 0 : index
    %79 = vector.load %arg2[%78, %c0_22, %c0_23] : memref<8x8x384xf32, #tpu.memory_space<vmem>>, vector<1x8x384xf32>
    %80 = vector.shape_cast %79 : vector<1x8x384xf32> to vector<8x384xf32>
    %cst_24 = arith.constant dense<0.000000e+00> : vector<8x384xf32>
    %81 = tpu.matmul %73, %3, %cst_24 {dimension_numbers = #tpu.dot_dimension_numbers<[1], [0], [0], [1], [0, 0, 1, 1], [], []>} : vector<8x128xf32>, vector<128x384xf32>, vector<8x384xf32> -> vector<8x384xf32>
    %82 = vector.extract_strided_slice %80 {offsets = [0, 0], sizes = [8, 128], strides = [1, 1]} : vector<8x384xf32> to vector<8x128xf32>
    %83 = vector.extract_strided_slice %81 {offsets = [0, 0], sizes = [8, 128], strides = [1, 1]} : vector<8x384xf32> to vector<8x128xf32>
    %84 = arith.addf %82, %83 : vector<8x128xf32>
    %85 = arith.negf %84 : vector<8x128xf32>
    %86 = math.exp %85 : vector<8x128xf32>
    %cst_25 = arith.constant 1.000000e+00 : f32
    %87 = vector.broadcast %cst_25 : f32 to vector<8x128xf32>
    %88 = arith.addf %87, %86 : vector<8x128xf32>
    %89 = arith.divf %87, %88 : vector<8x128xf32>
    %90 = vector.extract_strided_slice %80 {offsets = [0, 128], sizes = [8, 128], strides = [1, 1]} : vector<8x384xf32> to vector<8x128xf32>
    %91 = vector.extract_strided_slice %81 {offsets = [0, 128], sizes = [8, 128], strides = [1, 1]} : vector<8x384xf32> to vector<8x128xf32>
    %92 = arith.addf %90, %91 : vector<8x128xf32>
    %93 = arith.negf %92 : vector<8x128xf32>
    %94 = math.exp %93 : vector<8x128xf32>
    %cst_26 = arith.constant 1.000000e+00 : f32
    %95 = vector.broadcast %cst_26 : f32 to vector<8x128xf32>
    %96 = arith.addf %95, %94 : vector<8x128xf32>
    %97 = arith.divf %95, %96 : vector<8x128xf32>
    %98 = vector.extract_strided_slice %80 {offsets = [0, 256], sizes = [8, 128], strides = [1, 1]} : vector<8x384xf32> to vector<8x128xf32>
    %99 = vector.extract_strided_slice %81 {offsets = [0, 256], sizes = [8, 128], strides = [1, 1]} : vector<8x384xf32> to vector<8x128xf32>
    %100 = arith.addf %99, %6 : vector<8x128xf32>
    %101 = arith.mulf %89, %100 : vector<8x128xf32>
    %102 = arith.addf %98, %101 : vector<8x128xf32>
    %103 = math.tanh %102 : vector<8x128xf32>
    %cst_27 = arith.constant 1.000000e+00 : f32
    %104 = vector.broadcast %cst_27 : f32 to vector<8x128xf32>
    %105 = arith.subf %104, %97 : vector<8x128xf32>
    %106 = arith.mulf %105, %103 : vector<8x128xf32>
    %107 = arith.mulf %97, %73 : vector<8x128xf32>
    %108 = arith.addf %106, %107 : vector<8x128xf32>
    %109 = arith.index_cast %c2_i32 : i32 to index
    %c0_28 = arith.constant 0 : index
    %c0_29 = arith.constant 0 : index
    %110 = vector.load %arg6[%109, %c0_28, %c0_29] : memref<8x8x128xf32, #tpu.memory_space<vmem>>, vector<1x8x128xf32>
    %111 = vector.shape_cast %110 : vector<1x8x128xf32> to vector<8x128xf32>
    %112 = vector.shape_cast %108 : vector<8x128xf32> to vector<1x8x128xf32>
    tpu.vector_store %arg6[%109, %c0_28, %c0_29], %112 {strides = array<i32>} : memref<8x8x128xf32, #tpu.memory_space<vmem>>, vector<1x8x128xf32>,
    %c3_i32 = arith.constant 3 : i32
    %113 = arith.index_cast %c3_i32 : i32 to index
    %c0_30 = arith.constant 0 : index
    %c0_31 = arith.constant 0 : index
    %114 = vector.load %arg2[%113, %c0_30, %c0_31] : memref<8x8x384xf32, #tpu.memory_space<vmem>>, vector<1x8x384xf32>
    %115 = vector.shape_cast %114 : vector<1x8x384xf32> to vector<8x384xf32>
    %cst_32 = arith.constant dense<0.000000e+00> : vector<8x384xf32>
    %116 = tpu.matmul %108, %3, %cst_32 {dimension_numbers = #tpu.dot_dimension_numbers<[1], [0], [0], [1], [0, 0, 1, 1], [], []>} : vector<8x128xf32>, vector<128x384xf32>, vector<8x384xf32> -> vector<8x384xf32>
    %117 = vector.extract_strided_slice %115 {offsets = [0, 0], sizes = [8, 128], strides = [1, 1]} : vector<8x384xf32> to vector<8x128xf32>
    %118 = vector.extract_strided_slice %116 {offsets = [0, 0], sizes = [8, 128], strides = [1, 1]} : vector<8x384xf32> to vector<8x128xf32>
    %119 = arith.addf %117, %118 : vector<8x128xf32>
    %120 = arith.negf %119 : vector<8x128xf32>
    %121 = math.exp %120 : vector<8x128xf32>
    %cst_33 = arith.constant 1.000000e+00 : f32
    %122 = vector.broadcast %cst_33 : f32 to vector<8x128xf32>
    %123 = arith.addf %122, %121 : vector<8x128xf32>
    %124 = arith.divf %122, %123 : vector<8x128xf32>
    %125 = vector.extract_strided_slice %115 {offsets = [0, 128], sizes = [8, 128], strides = [1, 1]} : vector<8x384xf32> to vector<8x128xf32>
    %126 = vector.extract_strided_slice %116 {offsets = [0, 128], sizes = [8, 128], strides = [1, 1]} : vector<8x384xf32> to vector<8x128xf32>
    %127 = arith.addf %125, %126 : vector<8x128xf32>
    %128 = arith.negf %127 : vector<8x128xf32>
    %129 = math.exp %128 : vector<8x128xf32>
    %cst_34 = arith.constant 1.000000e+00 : f32
    %130 = vector.broadcast %cst_34 : f32 to vector<8x128xf32>
    %131 = arith.addf %130, %129 : vector<8x128xf32>
    %132 = arith.divf %130, %131 : vector<8x128xf32>
    %133 = vector.extract_strided_slice %115 {offsets = [0, 256], sizes = [8, 128], strides = [1, 1]} : vector<8x384xf32> to vector<8x128xf32>
    %134 = vector.extract_strided_slice %116 {offsets = [0, 256], sizes = [8, 128], strides = [1, 1]} : vector<8x384xf32> to vector<8x128xf32>
    %135 = arith.addf %134, %6 : vector<8x128xf32>
    %136 = arith.mulf %124, %135 : vector<8x128xf32>
    %137 = arith.addf %133, %136 : vector<8x128xf32>
    %138 = math.tanh %137 : vector<8x128xf32>
    %cst_35 = arith.constant 1.000000e+00 : f32
    %139 = vector.broadcast %cst_35 : f32 to vector<8x128xf32>
    %140 = arith.subf %139, %132 : vector<8x128xf32>
    %141 = arith.mulf %140, %138 : vector<8x128xf32>
    %142 = arith.mulf %132, %108 : vector<8x128xf32>
    %143 = arith.addf %141, %142 : vector<8x128xf32>
    %144 = arith.index_cast %c3_i32 : i32 to index
    %c0_36 = arith.constant 0 : index
    %c0_37 = arith.constant 0 : index
    %145 = vector.load %arg6[%144, %c0_36, %c0_37] : memref<8x8x128xf32, #tpu.memory_space<vmem>>, vector<1x8x128xf32>
    %146 = vector.shape_cast %145 : vector<1x8x128xf32> to vector<8x128xf32>
    %147 = vector.shape_cast %143 : vector<8x128xf32> to vector<1x8x128xf32>
    tpu.vector_store %arg6[%144, %c0_36, %c0_37], %147 {strides = array<i32>} : memref<8x8x128xf32, #tpu.memory_space<vmem>>, vector<1x8x128xf32>,
    %c4_i32 = arith.constant 4 : i32
    %148 = arith.index_cast %c4_i32 : i32 to index
    %c0_38 = arith.constant 0 : index
    %c0_39 = arith.constant 0 : index
    %149 = vector.load %arg2[%148, %c0_38, %c0_39] : memref<8x8x384xf32, #tpu.memory_space<vmem>>, vector<1x8x384xf32>
    %150 = vector.shape_cast %149 : vector<1x8x384xf32> to vector<8x384xf32>
    %cst_40 = arith.constant dense<0.000000e+00> : vector<8x384xf32>
    %151 = tpu.matmul %143, %3, %cst_40 {dimension_numbers = #tpu.dot_dimension_numbers<[1], [0], [0], [1], [0, 0, 1, 1], [], []>} : vector<8x128xf32>, vector<128x384xf32>, vector<8x384xf32> -> vector<8x384xf32>
    %152 = vector.extract_strided_slice %150 {offsets = [0, 0], sizes = [8, 128], strides = [1, 1]} : vector<8x384xf32> to vector<8x128xf32>
    %153 = vector.extract_strided_slice %151 {offsets = [0, 0], sizes = [8, 128], strides = [1, 1]} : vector<8x384xf32> to vector<8x128xf32>
    %154 = arith.addf %152, %153 : vector<8x128xf32>
    %155 = arith.negf %154 : vector<8x128xf32>
    %156 = math.exp %155 : vector<8x128xf32>
    %cst_41 = arith.constant 1.000000e+00 : f32
    %157 = vector.broadcast %cst_41 : f32 to vector<8x128xf32>
    %158 = arith.addf %157, %156 : vector<8x128xf32>
    %159 = arith.divf %157, %158 : vector<8x128xf32>
    %160 = vector.extract_strided_slice %150 {offsets = [0, 128], sizes = [8, 128], strides = [1, 1]} : vector<8x384xf32> to vector<8x128xf32>
    %161 = vector.extract_strided_slice %151 {offsets = [0, 128], sizes = [8, 128], strides = [1, 1]} : vector<8x384xf32> to vector<8x128xf32>
    %162 = arith.addf %160, %161 : vector<8x128xf32>
    %163 = arith.negf %162 : vector<8x128xf32>
    %164 = math.exp %163 : vector<8x128xf32>
    %cst_42 = arith.constant 1.000000e+00 : f32
    %165 = vector.broadcast %cst_42 : f32 to vector<8x128xf32>
    %166 = arith.addf %165, %164 : vector<8x128xf32>
    %167 = arith.divf %165, %166 : vector<8x128xf32>
    %168 = vector.extract_strided_slice %150 {offsets = [0, 256], sizes = [8, 128], strides = [1, 1]} : vector<8x384xf32> to vector<8x128xf32>
    %169 = vector.extract_strided_slice %151 {offsets = [0, 256], sizes = [8, 128], strides = [1, 1]} : vector<8x384xf32> to vector<8x128xf32>
    %170 = arith.addf %169, %6 : vector<8x128xf32>
    %171 = arith.mulf %159, %170 : vector<8x128xf32>
    %172 = arith.addf %168, %171 : vector<8x128xf32>
    %173 = math.tanh %172 : vector<8x128xf32>
    %cst_43 = arith.constant 1.000000e+00 : f32
    %174 = vector.broadcast %cst_43 : f32 to vector<8x128xf32>
    %175 = arith.subf %174, %167 : vector<8x128xf32>
    %176 = arith.mulf %175, %173 : vector<8x128xf32>
    %177 = arith.mulf %167, %143 : vector<8x128xf32>
    %178 = arith.addf %176, %177 : vector<8x128xf32>
    %179 = arith.index_cast %c4_i32 : i32 to index
    %c0_44 = arith.constant 0 : index
    %c0_45 = arith.constant 0 : index
    %180 = vector.load %arg6[%179, %c0_44, %c0_45] : memref<8x8x128xf32, #tpu.memory_space<vmem>>, vector<1x8x128xf32>
    %181 = vector.shape_cast %180 : vector<1x8x128xf32> to vector<8x128xf32>
    %182 = vector.shape_cast %178 : vector<8x128xf32> to vector<1x8x128xf32>
    tpu.vector_store %arg6[%179, %c0_44, %c0_45], %182 {strides = array<i32>} : memref<8x8x128xf32, #tpu.memory_space<vmem>>, vector<1x8x128xf32>,
    %c5_i32 = arith.constant 5 : i32
    %183 = arith.index_cast %c5_i32 : i32 to index
    %c0_46 = arith.constant 0 : index
    %c0_47 = arith.constant 0 : index
    %184 = vector.load %arg2[%183, %c0_46, %c0_47] : memref<8x8x384xf32, #tpu.memory_space<vmem>>, vector<1x8x384xf32>
    %185 = vector.shape_cast %184 : vector<1x8x384xf32> to vector<8x384xf32>
    %cst_48 = arith.constant dense<0.000000e+00> : vector<8x384xf32>
    %186 = tpu.matmul %178, %3, %cst_48 {dimension_numbers = #tpu.dot_dimension_numbers<[1], [0], [0], [1], [0, 0, 1, 1], [], []>} : vector<8x128xf32>, vector<128x384xf32>, vector<8x384xf32> -> vector<8x384xf32>
    %187 = vector.extract_strided_slice %185 {offsets = [0, 0], sizes = [8, 128], strides = [1, 1]} : vector<8x384xf32> to vector<8x128xf32>
    %188 = vector.extract_strided_slice %186 {offsets = [0, 0], sizes = [8, 128], strides = [1, 1]} : vector<8x384xf32> to vector<8x128xf32>
    %189 = arith.addf %187, %188 : vector<8x128xf32>
    %190 = arith.negf %189 : vector<8x128xf32>
    %191 = math.exp %190 : vector<8x128xf32>
    %cst_49 = arith.constant 1.000000e+00 : f32
    %192 = vector.broadcast %cst_49 : f32 to vector<8x128xf32>
    %193 = arith.addf %192, %191 : vector<8x128xf32>
    %194 = arith.divf %192, %193 : vector<8x128xf32>
    %195 = vector.extract_strided_slice %185 {offsets = [0, 128], sizes = [8, 128], strides = [1, 1]} : vector<8x384xf32> to vector<8x128xf32>
    %196 = vector.extract_strided_slice %186 {offsets = [0, 128], sizes = [8, 128], strides = [1, 1]} : vector<8x384xf32> to vector<8x128xf32>
    %197 = arith.addf %195, %196 : vector<8x128xf32>
    %198 = arith.negf %197 : vector<8x128xf32>
    %199 = math.exp %198 : vector<8x128xf32>
    %cst_50 = arith.constant 1.000000e+00 : f32
    %200 = vector.broadcast %cst_50 : f32 to vector<8x128xf32>
    %201 = arith.addf %200, %199 : vector<8x128xf32>
    %202 = arith.divf %200, %201 : vector<8x128xf32>
    %203 = vector.extract_strided_slice %185 {offsets = [0, 256], sizes = [8, 128], strides = [1, 1]} : vector<8x384xf32> to vector<8x128xf32>
    %204 = vector.extract_strided_slice %186 {offsets = [0, 256], sizes = [8, 128], strides = [1, 1]} : vector<8x384xf32> to vector<8x128xf32>
    %205 = arith.addf %204, %6 : vector<8x128xf32>
    %206 = arith.mulf %194, %205 : vector<8x128xf32>
    %207 = arith.addf %203, %206 : vector<8x128xf32>
    %208 = math.tanh %207 : vector<8x128xf32>
    %cst_51 = arith.constant 1.000000e+00 : f32
    %209 = vector.broadcast %cst_51 : f32 to vector<8x128xf32>
    %210 = arith.subf %209, %202 : vector<8x128xf32>
    %211 = arith.mulf %210, %208 : vector<8x128xf32>
    %212 = arith.mulf %202, %178 : vector<8x128xf32>
    %213 = arith.addf %211, %212 : vector<8x128xf32>
    %214 = arith.index_cast %c5_i32 : i32 to index
    %c0_52 = arith.constant 0 : index
    %c0_53 = arith.constant 0 : index
    %215 = vector.load %arg6[%214, %c0_52, %c0_53] : memref<8x8x128xf32, #tpu.memory_space<vmem>>, vector<1x8x128xf32>
    %216 = vector.shape_cast %215 : vector<1x8x128xf32> to vector<8x128xf32>
    %217 = vector.shape_cast %213 : vector<8x128xf32> to vector<1x8x128xf32>
    tpu.vector_store %arg6[%214, %c0_52, %c0_53], %217 {strides = array<i32>} : memref<8x8x128xf32, #tpu.memory_space<vmem>>, vector<1x8x128xf32>,
    %c6_i32 = arith.constant 6 : i32
    %218 = arith.index_cast %c6_i32 : i32 to index
    %c0_54 = arith.constant 0 : index
    %c0_55 = arith.constant 0 : index
    %219 = vector.load %arg2[%218, %c0_54, %c0_55] : memref<8x8x384xf32, #tpu.memory_space<vmem>>, vector<1x8x384xf32>
    %220 = vector.shape_cast %219 : vector<1x8x384xf32> to vector<8x384xf32>
    %cst_56 = arith.constant dense<0.000000e+00> : vector<8x384xf32>
    %221 = tpu.matmul %213, %3, %cst_56 {dimension_numbers = #tpu.dot_dimension_numbers<[1], [0], [0], [1], [0, 0, 1, 1], [], []>} : vector<8x128xf32>, vector<128x384xf32>, vector<8x384xf32> -> vector<8x384xf32>
    %222 = vector.extract_strided_slice %220 {offsets = [0, 0], sizes = [8, 128], strides = [1, 1]} : vector<8x384xf32> to vector<8x128xf32>
    %223 = vector.extract_strided_slice %221 {offsets = [0, 0], sizes = [8, 128], strides = [1, 1]} : vector<8x384xf32> to vector<8x128xf32>
    %224 = arith.addf %222, %223 : vector<8x128xf32>
    %225 = arith.negf %224 : vector<8x128xf32>
    %226 = math.exp %225 : vector<8x128xf32>
    %cst_57 = arith.constant 1.000000e+00 : f32
    %227 = vector.broadcast %cst_57 : f32 to vector<8x128xf32>
    %228 = arith.addf %227, %226 : vector<8x128xf32>
    %229 = arith.divf %227, %228 : vector<8x128xf32>
    %230 = vector.extract_strided_slice %220 {offsets = [0, 128], sizes = [8, 128], strides = [1, 1]} : vector<8x384xf32> to vector<8x128xf32>
    %231 = vector.extract_strided_slice %221 {offsets = [0, 128], sizes = [8, 128], strides = [1, 1]} : vector<8x384xf32> to vector<8x128xf32>
    %232 = arith.addf %230, %231 : vector<8x128xf32>
    %233 = arith.negf %232 : vector<8x128xf32>
    %234 = math.exp %233 : vector<8x128xf32>
    %cst_58 = arith.constant 1.000000e+00 : f32
    %235 = vector.broadcast %cst_58 : f32 to vector<8x128xf32>
    %236 = arith.addf %235, %234 : vector<8x128xf32>
    %237 = arith.divf %235, %236 : vector<8x128xf32>
    %238 = vector.extract_strided_slice %220 {offsets = [0, 256], sizes = [8, 128], strides = [1, 1]} : vector<8x384xf32> to vector<8x128xf32>
    %239 = vector.extract_strided_slice %221 {offsets = [0, 256], sizes = [8, 128], strides = [1, 1]} : vector<8x384xf32> to vector<8x128xf32>
    %240 = arith.addf %239, %6 : vector<8x128xf32>
    %241 = arith.mulf %229, %240 : vector<8x128xf32>
    %242 = arith.addf %238, %241 : vector<8x128xf32>
    %243 = math.tanh %242 : vector<8x128xf32>
    %cst_59 = arith.constant 1.000000e+00 : f32
    %244 = vector.broadcast %cst_59 : f32 to vector<8x128xf32>
    %245 = arith.subf %244, %237 : vector<8x128xf32>
    %246 = arith.mulf %245, %243 : vector<8x128xf32>
    %247 = arith.mulf %237, %213 : vector<8x128xf32>
    %248 = arith.addf %246, %247 : vector<8x128xf32>
    %249 = arith.index_cast %c6_i32 : i32 to index
    %c0_60 = arith.constant 0 : index
    %c0_61 = arith.constant 0 : index
    %250 = vector.load %arg6[%249, %c0_60, %c0_61] : memref<8x8x128xf32, #tpu.memory_space<vmem>>, vector<1x8x128xf32>
    %251 = vector.shape_cast %250 : vector<1x8x128xf32> to vector<8x128xf32>
    %252 = vector.shape_cast %248 : vector<8x128xf32> to vector<1x8x128xf32>
    tpu.vector_store %arg6[%249, %c0_60, %c0_61], %252 {strides = array<i32>} : memref<8x8x128xf32, #tpu.memory_space<vmem>>, vector<1x8x128xf32>,
    %c7_i32 = arith.constant 7 : i32
    %253 = arith.index_cast %c7_i32 : i32 to index
    %c0_62 = arith.constant 0 : index
    %c0_63 = arith.constant 0 : index
    %254 = vector.load %arg2[%253, %c0_62, %c0_63] : memref<8x8x384xf32, #tpu.memory_space<vmem>>, vector<1x8x384xf32>
    %255 = vector.shape_cast %254 : vector<1x8x384xf32> to vector<8x384xf32>
    %cst_64 = arith.constant dense<0.000000e+00> : vector<8x384xf32>
    %256 = tpu.matmul %248, %3, %cst_64 {dimension_numbers = #tpu.dot_dimension_numbers<[1], [0], [0], [1], [0, 0, 1, 1], [], []>} : vector<8x128xf32>, vector<128x384xf32>, vector<8x384xf32> -> vector<8x384xf32>
    %257 = vector.extract_strided_slice %255 {offsets = [0, 0], sizes = [8, 128], strides = [1, 1]} : vector<8x384xf32> to vector<8x128xf32>
    %258 = vector.extract_strided_slice %256 {offsets = [0, 0], sizes = [8, 128], strides = [1, 1]} : vector<8x384xf32> to vector<8x128xf32>
    %259 = arith.addf %257, %258 : vector<8x128xf32>
    %260 = arith.negf %259 : vector<8x128xf32>
    %261 = math.exp %260 : vector<8x128xf32>
    %cst_65 = arith.constant 1.000000e+00 : f32
    %262 = vector.broadcast %cst_65 : f32 to vector<8x128xf32>
    %263 = arith.addf %262, %261 : vector<8x128xf32>
    %264 = arith.divf %262, %263 : vector<8x128xf32>
    %265 = vector.extract_strided_slice %255 {offsets = [0, 128], sizes = [8, 128], strides = [1, 1]} : vector<8x384xf32> to vector<8x128xf32>
    %266 = vector.extract_strided_slice %256 {offsets = [0, 128], sizes = [8, 128], strides = [1, 1]} : vector<8x384xf32> to vector<8x128xf32>
    %267 = arith.addf %265, %266 : vector<8x128xf32>
    %268 = arith.negf %267 : vector<8x128xf32>
    %269 = math.exp %268 : vector<8x128xf32>
    %cst_66 = arith.constant 1.000000e+00 : f32
    %270 = vector.broadcast %cst_66 : f32 to vector<8x128xf32>
    %271 = arith.addf %270, %269 : vector<8x128xf32>
    %272 = arith.divf %270, %271 : vector<8x128xf32>
    %273 = vector.extract_strided_slice %255 {offsets = [0, 256], sizes = [8, 128], strides = [1, 1]} : vector<8x384xf32> to vector<8x128xf32>
    %274 = vector.extract_strided_slice %256 {offsets = [0, 256], sizes = [8, 128], strides = [1, 1]} : vector<8x384xf32> to vector<8x128xf32>
    %275 = arith.addf %274, %6 : vector<8x128xf32>
    %276 = arith.mulf %264, %275 : vector<8x128xf32>
    %277 = arith.addf %273, %276 : vector<8x128xf32>
    %278 = math.tanh %277 : vector<8x128xf32>
    %cst_67 = arith.constant 1.000000e+00 : f32
    %279 = vector.broadcast %cst_67 : f32 to vector<8x128xf32>
    %280 = arith.subf %279, %272 : vector<8x128xf32>
    %281 = arith.mulf %280, %278 : vector<8x128xf32>
    %282 = arith.mulf %272, %248 : vector<8x128xf32>
    %283 = arith.addf %281, %282 : vector<8x128xf32>
    %284 = arith.index_cast %c7_i32 : i32 to index
    %c0_68 = arith.constant 0 : index
    %c0_69 = arith.constant 0 : index
    %285 = vector.load %arg6[%284, %c0_68, %c0_69] : memref<8x8x128xf32, #tpu.memory_space<vmem>>, vector<1x8x128xf32>
    %286 = vector.shape_cast %285 : vector<1x8x128xf32> to vector<8x128xf32>
    %287 = vector.shape_cast %283 : vector<8x128xf32> to vector<1x8x128xf32>
    tpu.vector_store %arg6[%284, %c0_68, %c0_69], %287 {strides = array<i32>} : memref<8x8x128xf32, #tpu.memory_space<vmem>>, vector<1x8x128xf32>,
    %c8_i32 = arith.constant 8 : i32
    %c0_70 = arith.constant 0 : index
    %c0_71 = arith.constant 0 : index
    %288 = vector.load %arg7[%c0_70, %c0_71] : memref<8x128xf32, #tpu.memory_space<vmem>>, vector<8x128xf32>
    tpu.vector_store %arg7[%c0_70, %c0_71], %283 {strides = array<i32>} : memref<8x128xf32, #tpu.memory_space<vmem>>, vector<8x128xf32>,
    return
  }
  func.func @transform_0(%arg0: i32, %arg1: i32) -> (i32, i32, i32) {
    %c0_i32 = arith.constant 0 : i32
    %c0_i32_0 = arith.constant 0 : i32
    return %arg1, %arg0, %c0_i32 : i32, i32, i32
  }
  func.func @transform_1(%arg0: i32, %arg1: i32) -> (i32, i32, i32) {
    %c0_i32 = arith.constant 0 : i32
    %c0_i32_0 = arith.constant 0 : i32
    %c0_i32_1 = arith.constant 0 : i32
    return %c0_i32, %arg0, %c0_i32_0 : i32, i32, i32
  }
  func.func @transform_2(%arg0: i32, %arg1: i32) -> (i32, i32) {
    %c0_i32 = arith.constant 0 : i32
    %c0_i32_0 = arith.constant 0 : i32
    %c0_i32_1 = arith.constant 0 : i32
    return %c0_i32, %c0_i32_0 : i32, i32
  }
  func.func @transform_3(%arg0: i32, %arg1: i32) -> (i32, i32) {
    %c0_i32 = arith.constant 0 : i32
    %c0_i32_0 = arith.constant 0 : i32
    %c0_i32_1 = arith.constant 0 : i32
    return %c0_i32, %c0_i32_0 : i32, i32
  }
  func.func @transform_4(%arg0: i32, %arg1: i32) -> (i32, i32, i32) {
    %c0_i32 = arith.constant 0 : i32
    %c0_i32_0 = arith.constant 0 : i32
    return %arg1, %arg0, %c0_i32 : i32, i32, i32
  }
}

</mosaic_0001>

<llo_original>
// kernel: my_gru_pallas.2
$region0: #{my_gru_pallas.2}
  #allocation0 [shape = 'u32[]', space=smem, size = 0x4, offset = 0x4, fixed_abs, tag = 'smem constant byte address 0x4 - core index']
  #allocation1 [shape = 'u32[144,128]{1,0:T(1,128)}', space=vmem, size = 0x12000, scoped, tag = 'internal scratch']
  %s0 = inlined_call_operand.vmem [shape: f32[64,16], index: 0, kind: input, shape index: {}]
  %s1 = inlined_call_operand.vmem [shape: f32[16,384], index: 1, kind: input, shape index: {}]
  %s2 = inlined_call_operand.vmem [shape: f32[1,384], index: 2, kind: input, shape index: {}]
  %s3 = inlined_call_operand.vmem [shape: f32[64,384], index: 3, kind: output, shape index: {}]
  %s4 = sld [smem:[#allocation0]]
  $region22: #{my_gru_pallas.2} parent=0
    _
  %s6 = ssub.s32 1, %s4
  %s7 = scalar_select 0, %s6, %s4
  // Predicated region
  $region2: #{my_gru_pallas.2} parent=0 // pred_check
    _
  $region3: #{my_gru_pallas.2} parent=0 // pred_check_branch
    %9 = sbr.rel (0) target = $region5
  $region4: #{my_gru_pallas.2} parent=0 // pred_region
    _
  $region5: #{my_gru_pallas.2} parent=0 // pred_fallthru
    _
  // Predicated region
  $region6: #{my_gru_pallas.2} parent=0 // pred_check
    _
  $region7: #{my_gru_pallas.2} parent=0 // pred_check_branch
    %11 = sbr.rel (0) target = $region9
  $region8: #{my_gru_pallas.2} parent=0 // pred_region
    _
  $region9: #{my_gru_pallas.2} parent=0 // pred_fallthru
    _
  // Predicated region
  $region10: #{my_gru_pallas.2} parent=0 // pred_check
    _
  $region11: #{my_gru_pallas.2} parent=0 // pred_check_branch
    %13 = sbr.rel (0) target = $region13
  $region12: #{my_gru_pallas.2} parent=0 // pred_region
    _
  $region13: #{my_gru_pallas.2} parent=0 // pred_fallthru
    _
  %v14 = vld [vmem:[%s0] sm:$0xff]
  %v15 = vld [vmem:[%s0 + $0x8] sm:$0xff]
  %v16 = vld [vmem:[%s0 + $0x10] sm:$0xff]
  %v17 = vld [vmem:[%s0 + $0x18] sm:$0xff]
  %v18 = vld [vmem:[%s0 + $0x20] sm:$0xff]
  %v19 = vld [vmem:[%s0 + $0x28] sm:$0xff]
  %v20 = vld [vmem:[%s0 + $0x30] sm:$0xff]
  %v21 = vld [vmem:[%s0 + $0x38] sm:$0xff]
  %v22 = vld [vmem:[%s1] sm:$0xff]
  %v23 = vld [vmem:[%s1 + $0x8] sm:$0xff]
  %v24 = vld [vmem:[%s1 + $0x10] sm:$0xff]
  %v25 = vld [vmem:[%s1 + $0x18] sm:$0xff]
  %v26 = vld [vmem:[%s1 + $0x20] sm:$0xff]
  %v27 = vld [vmem:[%s1 + $0x28] sm:$0xff]
  %v28 = vld [vmem:[%s2] sm:$0x7]
  %v30 = vlaneseq
  %v31 = vshrl.u32 %v30, 7
  %v32 = vsub.s32 0, %v31
  %v33 = vrot.slane %v28, %v32
  %v34 = vlaneseq
  %v35 = vshrl.u32 %v34, 7
  %v36 = vsub.s32 1, %v35
  %v37 = vrot.slane %v28, %v36
  %v38 = vlaneseq
  %v39 = vshrl.u32 %v38, 7
  %v40 = vsub.s32 2, %v39
  %v41 = vrot.slane %v28, %v40
  %vm45 = vcmask 130048
  %v47 = vsel %vm45, %v14, 0
  %v50 = vsel %vm45, %v15, 0
  %v53 = vsel %vm45, %v16, 0
  %v56 = vsel %vm45, %v17, 0
  %v59 = vsel %vm45, %v18, 0
  %v62 = vsel %vm45, %v19, 0
  %v65 = vsel %vm45, %v20, 0
  %v68 = vsel %vm45, %v21, 0
  %70 = vmatprep.subr.mxu0 0.0
  %71 = vmatpush1.msra.mxu0 0.0
  %72 = vmatprep.subr.mxu0 0.0
  %73 = vmatpush1.msra.mxu0 0.0
  %74 = vmatprep.subr.mxu0 0.0
  %75 = vmatpush1.msra.mxu0 0.0
  %76 = vmatprep.subr.mxu0 0.0
  %77 = vmatpush1.msra.mxu0 0.0
  %78 = vmatprep.subr.mxu0 0.0
  %79 = vmatpush1.msra.mxu0 0.0
  %80 = vmatprep.subr.mxu0 0.0
  %81 = vmatpush1.msra.mxu0 0.0
  %82 = vmatprep.subr.mxu0 0.0
  %83 = vmatpush1.msra.mxu0 0.0
  %84 = vmatprep.subr.mxu0 0.0
  %85 = vmatpush1.msra.mxu0 0.0
  %86 = vmatprep.subr.mxu0 0.0
  %87 = vmatpush1.msra.mxu0 0.0
  %88 = vmatprep.subr.mxu0 0.0
  %89 = vmatpush1.msra.mxu0 0.0
  %90 = vmatprep.subr.mxu0 0.0
  %91 = vmatpush1.msra.mxu0 0.0
  %92 = vmatprep.subr.mxu0 0.0
  %93 = vmatpush1.msra.mxu0 0.0
  %94 = vmatprep.subr.mxu0 0.0
  %95 = vmatpush1.msra.mxu0 0.0
  %96 = vmatprep.subr.mxu0 0.0
  %97 = vmatpush1.msra.mxu0 0.0
  %98 = vmatprep.subr.mxu0 %v26
  %99 = vmatpush1.msra.mxu0 %v25
  %100 = vmatprep.subr.mxu0 %v23
  %101 = vmatpush1.msra.mxu0 %v22
  %102 = vmatprep.subr.mxu0 0.0
  %103 = vmatpush2.msra.mxu0 0.0
  %104 = vmatprep.subr.mxu0 0.0
  %105 = vmatpush2.msra.mxu0 0.0
  %106 = vmatprep.subr.mxu0 0.0
  %107 = vmatpush2.msra.mxu0 0.0
  %108 = vmatprep.subr.mxu0 0.0
  %109 = vmatpush2.msra.mxu0 0.0
  %110 = vmatprep.subr.mxu0 0.0
  %111 = vmatpush2.msra.mxu0 0.0
  %112 = vmatprep.subr.mxu0 0.0
  %113 = vmatpush2.msra.mxu0 0.0
  %114 = vmatprep.subr.mxu0 0.0
  %115 = vmatpush2.msra.mxu0 0.0
  %116 = vmatprep.subr.mxu0 0.0
  %117 = vmatpush2.msra.mxu0 0.0
  %118 = vmatprep.subr.mxu0 0.0
  %119 = vmatpush2.msra.mxu0 0.0
  %120 = vmatprep.subr.mxu0 0.0
  %121 = vmatpush2.msra.mxu0 0.0
  %122 = vmatprep.subr.mxu0 0.0
  %123 = vmatpush2.msra.mxu0 0.0
  %124 = vmatprep.subr.mxu0 0.0
  %125 = vmatpush2.msra.mxu0 0.0
  %126 = vmatprep.subr.mxu0 0.0
  %127 = vmatpush2.msra.mxu0 0.0
  %128 = vmatprep.subr.mxu0 0.0
  %129 = vmatpush2.msra.mxu0 0.0
  %130 = vmatprep.subr.mxu0 0.0
  %131 = vmatpush2.msra.mxu0 0.0
  %132 = vmatprep.subr.mxu0 0.0
  %133 = vmatpush2.msra.mxu0 0.0
  %134 = vmatprep.mubr.f32.mxu0 0.0
  %135 = vmatmul.mubr.f32.gmra.mxu0 %v47
  %v136 = vpop.f32.mrf.mxu0
  %v137 = vadd.f32 %v33, %v136
  %v138 = vpop.f32.mrf.mxu0
  %v139 = vadd.f32 %v37, %v138
  %140 = vmatprep.mubr.f32.mxu0 0.0
  %141 = vmatmul.mubr.f32.gmra.mxu0 %v50
  %v142 = vpop.f32.mrf.mxu0
  %v143 = vadd.f32 %v33, %v142
  %v144 = vpop.f32.mrf.mxu0
  %v145 = vadd.f32 %v37, %v144
  %146 = vmatprep.mubr.f32.mxu0 0.0
  %147 = vmatmul.mubr.f32.gmra.mxu0 %v53
  %v148 = vpop.f32.mrf.mxu0
  %v149 = vadd.f32 %v33, %v148
  %v150 = vpop.f32.mrf.mxu0
  %v151 = vadd.f32 %v37, %v150
  %152 = vmatprep.mubr.f32.mxu0 0.0
  %153 = vmatmul.mubr.f32.gmra.mxu0 %v56
  %v154 = vpop.f32.mrf.mxu0
  %v155 = vadd.f32 %v33, %v154
  %v156 = vpop.f32.mrf.mxu0
  %v157 = vadd.f32 %v37, %v156
  %158 = vmatprep.mubr.f32.mxu0 0.0
  %159 = vmatmul.mubr.f32.gmra.mxu0 %v59
  %v160 = vpop.f32.mrf.mxu0
  %v161 = vadd.f32 %v33, %v160
  %v162 = vpop.f32.mrf.mxu0
  %v163 = vadd.f32 %v37, %v162
  %164 = vmatprep.mubr.f32.mxu0 0.0
  %165 = vmatmul.mubr.f32.gmra.mxu0 %v62
  %v166 = vpop.f32.mrf.mxu0
  %v167 = vadd.f32 %v33, %v166
  %v168 = vpop.f32.mrf.mxu0
  %v169 = vadd.f32 %v37, %v168
  %170 = vmatprep.mubr.f32.mxu0 0.0
  %171 = vmatmul.mubr.f32.gmra.mxu0 %v65
  %v172 = vpop.f32.mrf.mxu0
  %v173 = vadd.f32 %v33, %v172
  %v174 = vpop.f32.mrf.mxu0
  %v175 = vadd.f32 %v37, %v174
  %176 = vmatprep.mubr.f32.mxu0 0.0
  %177 = vmatmul.mubr.f32.gmra.mxu0 %v68
  %v178 = vpop.f32.mrf.mxu0
  %v179 = vadd.f32 %v33, %v178
  %v180 = vpop.f32.mrf.mxu0
  %v181 = vadd.f32 %v37, %v180
  %182 = vdwg.mxu0
  %183 = vmatprep.subr.mxu0 0.0
  %184 = vmatpush1.msra.mxu0 0.0
  %185 = vmatprep.subr.mxu0 0.0
  %186 = vmatpush1.msra.mxu0 0.0
  %187 = vmatprep.subr.mxu0 0.0
  %188 = vmatpush1.msra.mxu0 0.0
  %189 = vmatprep.subr.mxu0 0.0
  %190 = vmatpush1.msra.mxu0 0.0
  %191 = vmatprep.subr.mxu0 0.0
  %192 = vmatpush1.msra.mxu0 0.0
  %193 = vmatprep.subr.mxu0 0.0
  %194 = vmatpush1.msra.mxu0 0.0
  %195 = vmatprep.subr.mxu0 0.0
  %196 = vmatpush1.msra.mxu0 0.0
  %197 = vmatprep.subr.mxu0 0.0
  %198 = vmatpush1.msra.mxu0 0.0
  %199 = vmatprep.subr.mxu0 0.0
  %200 = vmatpush1.msra.mxu0 0.0
  %201 = vmatprep.subr.mxu0 0.0
  %202 = vmatpush1.msra.mxu0 0.0
  %203 = vmatprep.subr.mxu0 0.0
  %204 = vmatpush1.msra.mxu0 0.0
  %205 = vmatprep.subr.mxu0 0.0
  %206 = vmatpush1.msra.mxu0 0.0
  %207 = vmatprep.subr.mxu0 0.0
  %208 = vmatpush1.msra.mxu0 0.0
  %209 = vmatprep.subr.mxu0 0.0
  %210 = vmatpush1.msra.mxu0 0.0
  %211 = vmatprep.subr.mxu0 0.0
  %212 = vmatpush1.msra.mxu0 %v27
  %213 = vmatprep.subr.mxu0 0.0
  %214 = vmatpush1.msra.mxu0 %v24
  %215 = vmatprep.subr.mxu0 0.0
  %216 = vmatpush2.msra.mxu0 0.0
  %217 = vmatprep.subr.mxu0 0.0
  %218 = vmatpush2.msra.mxu0 0.0
  %219 = vmatprep.subr.mxu0 0.0
  %220 = vmatpush2.msra.mxu0 0.0
  %221 = vmatprep.subr.mxu0 0.0
  %222 = vmatpush2.msra.mxu0 0.0
  %223 = vmatprep.subr.mxu0 0.0
  %224 = vmatpush2.msra.mxu0 0.0
  %225 = vmatprep.subr.mxu0 0.0
  %226 = vmatpush2.msra.mxu0 0.0
  %227 = vmatprep.subr.mxu0 0.0
  %228 = vmatpush2.msra.mxu0 0.0
  %229 = vmatprep.subr.mxu0 0.0
  %230 = vmatpush2.msra.mxu0 0.0
  %231 = vmatprep.subr.mxu0 0.0
  %232 = vmatpush2.msra.mxu0 0.0
  %233 = vmatprep.subr.mxu0 0.0
  %234 = vmatpush2.msra.mxu0 0.0
  %235 = vmatprep.subr.mxu0 0.0
  %236 = vmatpush2.msra.mxu0 0.0
  %237 = vmatprep.subr.mxu0 0.0
  %238 = vmatpush2.msra.mxu0 0.0
  %239 = vmatprep.subr.mxu0 0.0
  %240 = vmatpush2.msra.mxu0 0.0
  %241 = vmatprep.subr.mxu0 0.0
  %242 = vmatpush2.msra.mxu0 0.0
  %243 = vmatprep.subr.mxu0 0.0
  %244 = vmatpush2.msra.mxu0 0.0
  %245 = vmatprep.subr.mxu0 0.0
  %246 = vmatpush2.msra.mxu0 0.0
  %247 = vmatprep.mubr.f32.mxu0 0.0
  %248 = vmatmul.mubr.f32.gmra.mxu0 %v47
  %v249 = vpop.f32.mrf.mxu0
  %v250 = vadd.f32 %v41, %v249
  %v251 = vpop.f32.mrf.mxu0
  %252 = vmatprep.mubr.f32.mxu0 0.0
  %253 = vmatmul.mubr.f32.gmra.mxu0 %v50
  %v254 = vpop.f32.mrf.mxu0
  %v255 = vadd.f32 %v41, %v254
  %v256 = vpop.f32.mrf.mxu0
  %257 = vmatprep.mubr.f32.mxu0 0.0
  %258 = vmatmul.mubr.f32.gmra.mxu0 %v53
  %v259 = vpop.f32.mrf.mxu0
  %v260 = vadd.f32 %v41, %v259
  %v261 = vpop.f32.mrf.mxu0
  %262 = vmatprep.mubr.f32.mxu0 0.0
  %263 = vmatmul.mubr.f32.gmra.mxu0 %v56
  %v264 = vpop.f32.mrf.mxu0
  %v265 = vadd.f32 %v41, %v264
  %v266 = vpop.f32.mrf.mxu0
  %267 = vmatprep.mubr.f32.mxu0 0.0
  %268 = vmatmul.mubr.f32.gmra.mxu0 %v59
  %v269 = vpop.f32.mrf.mxu0
  %v270 = vadd.f32 %v41, %v269
  %v271 = vpop.f32.mrf.mxu0
  %272 = vmatprep.mubr.f32.mxu0 0.0
  %273 = vmatmul.mubr.f32.gmra.mxu0 %v62
  %v274 = vpop.f32.mrf.mxu0
  %v275 = vadd.f32 %v41, %v274
  %v276 = vpop.f32.mrf.mxu0
  %277 = vmatprep.mubr.f32.mxu0 0.0
  %278 = vmatmul.mubr.f32.gmra.mxu0 %v65
  %v279 = vpop.f32.mrf.mxu0
  %v280 = vadd.f32 %v41, %v279
  %v281 = vpop.f32.mrf.mxu0
  %282 = vmatprep.mubr.f32.mxu0 0.0
  %283 = vmatmul.mubr.f32.gmra.mxu0 %v68
  %v284 = vpop.f32.mrf.mxu0
  %v285 = vadd.f32 %v41, %v284
  %v286 = vpop.f32.mrf.mxu0
  %287 = vdwg.mxu0
  %288 = vst [vmem:[%s3] sm:$0xff] %v137
  %289 = vst [vmem:[%s3 + $0x8] sm:$0xff] %v139
  %290 = vst [vmem:[%s3 + $0x10] sm:$0xff] %v250
  %291 = vst [vmem:[%s3 + $0x18] sm:$0xff] %v143
  %292 = vst [vmem:[%s3 + $0x20] sm:$0xff] %v145
  %293 = vst [vmem:[%s3 + $0x28] sm:$0xff] %v255
  %294 = vst [vmem:[%s3 + $0x30] sm:$0xff] %v149
  %295 = vst [vmem:[%s3 + $0x38] sm:$0xff] %v151
  %296 = vst [vmem:[%s3 + $0x40] sm:$0xff] %v260
  %297 = vst [vmem:[%s3 + $0x48] sm:$0xff] %v155
  %298 = vst [vmem:[%s3 + $0x50] sm:$0xff] %v157
  %299 = vst [vmem:[%s3 + $0x58] sm:$0xff] %v265
  %300 = vst [vmem:[%s3 + $0x60] sm:$0xff] %v161
  %301 = vst [vmem:[%s3 + $0x68] sm:$0xff] %v163
  %302 = vst [vmem:[%s3 + $0x70] sm:$0xff] %v270
  %303 = vst [vmem:[%s3 + $0x78] sm:$0xff] %v167
  %304 = vst [vmem:[%s3 + $0x80] sm:$0xff] %v169
  %305 = vst [vmem:[%s3 + $0x88] sm:$0xff] %v275
  %306 = vst [vmem:[%s3 + $0x90] sm:$0xff] %v173
  %307 = vst [vmem:[%s3 + $0x98] sm:$0xff] %v175
  %308 = vst [vmem:[%s3 + $0xa0] sm:$0xff] %v280
  %309 = vst [vmem:[%s3 + $0xa8] sm:$0xff] %v179
  %310 = vst [vmem:[%s3 + $0xb0] sm:$0xff] %v181
  %311 = vst [vmem:[%s3 + $0xb8] sm:$0xff] %v285
  // Predicated region
  $region14: #{my_gru_pallas.2} parent=0 // pred_check
    _
  $region15: #{my_gru_pallas.2} parent=0 // pred_check_branch
    %313 = sbr.rel (0) target = $region17
  $region16: #{my_gru_pallas.2} parent=0 // pred_region
    _
  $region17: #{my_gru_pallas.2} parent=0 // pred_fallthru
    _
  // Predicated region
  $region18: #{my_gru_pallas.2} parent=0 // pred_check
    _
  $region19: #{my_gru_pallas.2} parent=0 // pred_check_branch
    %315 = sbr.rel (0) target = $region21
  $region20: #{my_gru_pallas.2} parent=0 // pred_region
    _
  $region21: #{my_gru_pallas.2} parent=0 // pred_fallthru
    _

// kernel: my_gru_pallas.3
$region0: #{my_gru_pallas.3}
  #allocation0 [shape = 'u32[]', space=smem, size = 0x4, offset = 0x4, fixed_abs, tag = 'smem constant byte address 0x4 - core index']
  #allocation1 [shape = 'u32[144,128]{1,0:T(1,128)}', space=vmem, size = 0x12000, scoped, tag = 'internal scratch']
  #allocation2 [shape = 'f32[8,128]{1,0:T(8,128)}', space=vmem, size = 0x1000, scoped, tag = 'scratch operand']
  %s0 = inlined_call_operand.vmem [shape: f32[8,8,384], index: 0, kind: input, shape index: {}]
  %s1 = inlined_call_operand.vmem [shape: f32[1,8,128], index: 1, kind: input, shape index: {}]
  %s2 = inlined_call_operand.vmem [shape: f32[128,384], index: 2, kind: input, shape index: {}]
  %s3 = inlined_call_operand.vmem [shape: f32[1,128], index: 3, kind: input, shape index: {}]
  %s4 = inlined_call_operand.vmem [shape: f32[8,8,128], index: 4, kind: output, shape index: {}]
  %s5 = sld [smem:[#allocation0]]
  $region30: #{my_gru_pallas.3} parent=0
    _
  %s7 = ssub.s32 1, %s5
  %s8 = scalar_select 0, %s7, %s5
  // Predicated region
  $region2: #{my_gru_pallas.3} parent=0 // pred_check
    _
  $region3: #{my_gru_pallas.3} parent=0 // pred_check_branch
    %10 = sbr.rel (0) target = $region5
  $region4: #{my_gru_pallas.3} parent=0 // pred_region
    _
  $region5: #{my_gru_pallas.3} parent=0 // pred_fallthru
    _
  // Predicated region
  $region6: #{my_gru_pallas.3} parent=0 // pred_check
    _
  $region7: #{my_gru_pallas.3} parent=0 // pred_check_branch
    %12 = sbr.rel (0) target = $region9
  $region8: #{my_gru_pallas.3} parent=0 // pred_region
    _
  $region9: #{my_gru_pallas.3} parent=0 // pred_fallthru
    _
  // Predicated region
  $region10: #{my_gru_pallas.3} parent=0 // pred_check
    _
  $region11: #{my_gru_pallas.3} parent=0 // pred_check_branch
    %14 = sbr.rel (0) target = $region13
  $region12: #{my_gru_pallas.3} parent=0 // pred_region
    _
  $region13: #{my_gru_pallas.3} parent=0 // pred_fallthru
    _
  // Predicated region
  $region14: #{my_gru_pallas.3} parent=0 // pred_check
    _
  $region15: #{my_gru_pallas.3} parent=0 // pred_check_branch
    %16 = sbr.rel (0) target = $region17
  $region16: #{my_gru_pallas.3} parent=0 // pred_region
    _
  $region17: #{my_gru_pallas.3} parent=0 // pred_fallthru
    _
  %p17 = scmp.eq.s32.totalorder 0, 0
  // Predicated region
  $region18: #{my_gru_pallas.3} parent=0 // pred_check
    %p18 = pneg %p17
  $region19: #{my_gru_pallas.3} parent=0 // pred_check_branch
    %20 = sbr.rel (%p18) target = $region21
  $region20: #{my_gru_pallas.3} parent=0 // pred_region
    %v21 = vld [vmem:[%s1] sm:$0xff]
    %22 = vst [vmem:[#allocation2] sm:$0xff] %v21
  $region21: #{my_gru_pallas.3} parent=0 // pred_fallthru
    _
  %v23 = vld [vmem:[%s2] sm:$0xff]
  %v24 = vld [vmem:[%s2 + $0x8] sm:$0xff]
  %v25 = vld [vmem:[%s2 + $0x10] sm:$0xff]
  %v26 = vld [vmem:[%s2 + $0x18] sm:$0xff]
  %v27 = vld [vmem:[%s2 + $0x20] sm:$0xff]
  %v28 = vld [vmem:[%s2 + $0x28] sm:$0xff]
  %v29 = vld [vmem:[%s2 + $0x30] sm:$0xff]
  %v30 = vld [vmem:[%s2 + $0x38] sm:$0xff]
  %v31 = vld [vmem:[%s2 + $0x40] sm:$0xff]
  %v32 = vld [vmem:[%s2 + $0x48] sm:$0xff]
  %v33 = vld [vmem:[%s2 + $0x50] sm:$0xff]
  %v34 = vld [vmem:[%s2 + $0x58] sm:$0xff]
  %v35 = vld [vmem:[%s2 + $0x60] sm:$0xff]
  %v36 = vld [vmem:[%s2 + $0x68] sm:$0xff]
  %v37 = vld [vmem:[%s2 + $0x70] sm:$0xff]
  %v38 = vld [vmem:[%s2 + $0x78] sm:$0xff]
  %v39 = vld [vmem:[%s2 + $0x80] sm:$0xff]
  %v40 = vld [vmem:[%s2 + $0x88] sm:$0xff]
  %v41 = vld [vmem:[%s2 + $0x90] sm:$0xff]
  %v42 = vld [vmem:[%s2 + $0x98] sm:$0xff]
  %v43 = vld [vmem:[%s2 + $0xa0] sm:$0xff]
  %v44 = vld [vmem:[%s2 + $0xa8] sm:$0xff]
  %v45 = vld [vmem:[%s2 + $0xb0] sm:$0xff]
  %v46 = vld [vmem:[%s2 + $0xb8] sm:$0xff]
  %v47 = vld [vmem:[%s2 + $0xc0] sm:$0xff]
  %v48 = vld [vmem:[%s2 + $0xc8] sm:$0xff]
  %v49 = vld [vmem:[%s2 + $0xd0] sm:$0xff]
  %v50 = vld [vmem:[%s2 + $0xd8] sm:$0xff]
  %v51 = vld [vmem:[%s2 + $0xe0] sm:$0xff]
  %v52 = vld [vmem:[%s2 + $0xe8] sm:$0xff]
  %v53 = vld [vmem:[%s2 + $0xf0] sm:$0xff]
  %v54 = vld [vmem:[%s2 + $0xf8] sm:$0xff]
  %v55 = vld [vmem:[%s2 + $0x100] sm:$0xff]
  %v56 = vld [vmem:[%s2 + $0x108] sm:$0xff]
  %v57 = vld [vmem:[%s2 + $0x110] sm:$0xff]
  %v58 = vld [vmem:[%s2 + $0x118] sm:$0xff]
  %v59 = vld [vmem:[%s2 + $0x120] sm:$0xff]
  %v60 = vld [vmem:[%s2 + $0x128] sm:$0xff]
  %v61 = vld [vmem:[%s2 + $0x130] sm:$0xff]
  %v62 = vld [vmem:[%s2 + $0x138] sm:$0xff]
  %v63 = vld [vmem:[%s2 + $0x140] sm:$0xff]
  %v64 = vld [vmem:[%s2 + $0x148] sm:$0xff]
  %v65 = vld [vmem:[%s2 + $0x150] sm:$0xff]
  %v66 = vld [vmem:[%s2 + $0x158] sm:$0xff]
  %v67 = vld [vmem:[%s2 + $0x160] sm:$0xff]
  %v68 = vld [vmem:[%s2 + $0x168] sm:$0xff]
  %v69 = vld [vmem:[%s2 + $0x170] sm:$0xff]
  %v70 = vld [vmem:[%s2 + $0x178] sm:$0xff]
  %v71 = vld [vmem:[%s3] sm:$0x1]
  %v73 = vlaneseq
  %v74 = vshrl.u32 %v73, 7
  %v75 = vsub.s32 0, %v74
  %v76 = vrot.slane %v71, %v75
  %v78 = vld [vmem:[#allocation2] sm:$0xff]
  %v79 = vld [vmem:[%s0] sm:$0xff]
  %v80 = vld [vmem:[%s0 + $0x8] sm:$0xff]
  %v81 = vld [vmem:[%s0 + $0x10] sm:$0xff]
  %82 = vmatprep.subr.mxu0 %v69
  %83 = vmatpush1.msra.mxu0 %v68
  %84 = vmatprep.subr.mxu0 %v66
  %85 = vmatpush1.msra.mxu0 %v65
  %86 = vmatprep.subr.mxu0 %v63
  %87 = vmatpush1.msra.mxu0 %v62
  %88 = vmatprep.subr.mxu0 %v60
  %89 = vmatpush1.msra.mxu0 %v59
  %90 = vmatprep.subr.mxu0 %v57
  %91 = vmatpush1.msra.mxu0 %v56
  %92 = vmatprep.subr.mxu0 %v54
  %93 = vmatpush1.msra.mxu0 %v53
  %94 = vmatprep.subr.mxu0 %v51
  %95 = vmatpush1.msra.mxu0 %v50
  %96 = vmatprep.subr.mxu0 %v48
  %97 = vmatpush1.msra.mxu0 %v47
  %98 = vmatprep.subr.mxu0 %v45
  %99 = vmatpush1.msra.mxu0 %v44
  %100 = vmatprep.subr.mxu0 %v42
  %101 = vmatpush1.msra.mxu0 %v41
  %102 = vmatprep.subr.mxu0 %v39
  %103 = vmatpush1.msra.mxu0 %v38
  %104 = vmatprep.subr.mxu0 %v36
  %105 = vmatpush1.msra.mxu0 %v35
  %106 = vmatprep.subr.mxu0 %v33
  %107 = vmatpush1.msra.mxu0 %v32
  %108 = vmatprep.subr.mxu0 %v30
  %109 = vmatpush1.msra.mxu0 %v29
  %110 = vmatprep.subr.mxu0 %v27
  %111 = vmatpush1.msra.mxu0 %v26
  %112 = vmatprep.subr.mxu0 %v24
  %113 = vmatpush1.msra.mxu0 %v23
  %114 = vmatprep.subr.mxu0 0.0
  %115 = vmatpush2.msra.mxu0 0.0
  %116 = vmatprep.subr.mxu0 0.0
  %117 = vmatpush2.msra.mxu0 0.0
  %118 = vmatprep.subr.mxu0 0.0
  %119 = vmatpush2.msra.mxu0 0.0
  %120 = vmatprep.subr.mxu0 0.0
  %121 = vmatpush2.msra.mxu0 0.0
  %122 = vmatprep.subr.mxu0 0.0
  %123 = vmatpush2.msra.mxu0 0.0
  %124 = vmatprep.subr.mxu0 0.0
  %125 = vmatpush2.msra.mxu0 0.0
  %126 = vmatprep.subr.mxu0 0.0
  %127 = vmatpush2.msra.mxu0 0.0
  %128 = vmatprep.subr.mxu0 0.0
  %129 = vmatpush2.msra.mxu0 0.0
  %130 = vmatprep.subr.mxu0 0.0
  %131 = vmatpush2.msra.mxu0 0.0
  %132 = vmatprep.subr.mxu0 0.0
  %133 = vmatpush2.msra.mxu0 0.0
  %134 = vmatprep.subr.mxu0 0.0
  %135 = vmatpush2.msra.mxu0 0.0
  %136 = vmatprep.subr.mxu0 0.0
  %137 = vmatpush2.msra.mxu0 0.0
  %138 = vmatprep.subr.mxu0 0.0
  %139 = vmatpush2.msra.mxu0 0.0
  %140 = vmatprep.subr.mxu0 0.0
  %141 = vmatpush2.msra.mxu0 0.0
  %142 = vmatprep.subr.mxu0 0.0
  %143 = vmatpush2.msra.mxu0 0.0
  %144 = vmatprep.subr.mxu0 0.0
  %145 = vmatpush2.msra.mxu0 0.0
  %146 = vmatprep.mubr.f32.mxu0 0.0
  %147 = vmatmul.mubr.f32.gmra.mxu0 %v78
  %v148 = vpop.f32.mrf.mxu0
  %v149 = vadd.f32 0.0, %v148
  %v150 = vpop.f32.mrf.mxu0
  %v151 = vadd.f32 0.0, %v150
  %152 = vdwg.mxu0
  %153 = vmatprep.subr.mxu0 0.0
  %154 = vmatpush1.msra.mxu0 %v70
  %155 = vmatprep.subr.mxu0 0.0
  %156 = vmatpush1.msra.mxu0 %v67
  %157 = vmatprep.subr.mxu0 0.0
  %158 = vmatpush1.msra.mxu0 %v64
  %159 = vmatprep.subr.mxu0 0.0
  %160 = vmatpush1.msra.mxu0 %v61
  %161 = vmatprep.subr.mxu0 0.0
  %162 = vmatpush1.msra.mxu0 %v58
  %163 = vmatprep.subr.mxu0 0.0
  %164 = vmatpush1.msra.mxu0 %v55
  %165 = vmatprep.subr.mxu0 0.0
  %166 = vmatpush1.msra.mxu0 %v52
  %167 = vmatprep.subr.mxu0 0.0
  %168 = vmatpush1.msra.mxu0 %v49
  %169 = vmatprep.subr.mxu0 0.0
  %170 = vmatpush1.msra.mxu0 %v46
  %171 = vmatprep.subr.mxu0 0.0
  %172 = vmatpush1.msra.mxu0 %v43
  %173 = vmatprep.subr.mxu0 0.0
  %174 = vmatpush1.msra.mxu0 %v40
  %175 = vmatprep.subr.mxu0 0.0
  %176 = vmatpush1.msra.mxu0 %v37
  %177 = vmatprep.subr.mxu0 0.0
  %178 = vmatpush1.msra.mxu0 %v34
  %179 = vmatprep.subr.mxu0 0.0
  %180 = vmatpush1.msra.mxu0 %v31
  %181 = vmatprep.subr.mxu0 0.0
  %182 = vmatpush1.msra.mxu0 %v28
  %183 = vmatprep.subr.mxu0 0.0
  %184 = vmatpush1.msra.mxu0 %v25
  %185 = vmatprep.subr.mxu0 0.0
  %186 = vmatpush2.msra.mxu0 0.0
  %187 = vmatprep.subr.mxu0 0.0
  %188 = vmatpush2.msra.mxu0 0.0
  %189 = vmatprep.subr.mxu0 0.0
  %190 = vmatpush2.msra.mxu0 0.0
  %191 = vmatprep.subr.mxu0 0.0
  %192 = vmatpush2.msra.mxu0 0.0
  %193 = vmatprep.subr.mxu0 0.0
  %194 = vmatpush2.msra.mxu0 0.0
  %195 = vmatprep.subr.mxu0 0.0
  %196 = vmatpush2.msra.mxu0 0.0
  %197 = vmatprep.subr.mxu0 0.0
  %198 = vmatpush2.msra.mxu0 0.0
  %199 = vmatprep.subr.mxu0 0.0
  %200 = vmatpush2.msra.mxu0 0.0
  %201 = vmatprep.subr.mxu0 0.0
  %202 = vmatpush2.msra.mxu0 0.0
  %203 = vmatprep.subr.mxu0 0.0
  %204 = vmatpush2.msra.mxu0 0.0
  %205 = vmatprep.subr.mxu0 0.0
  %206 = vmatpush2.msra.mxu0 0.0
  %207 = vmatprep.subr.mxu0 0.0
  %208 = vmatpush2.msra.mxu0 0.0
  %209 = vmatprep.subr.mxu0 0.0
  %210 = vmatpush2.msra.mxu0 0.0
  %211 = vmatprep.subr.mxu0 0.0
  %212 = vmatpush2.msra.mxu0 0.0
  %213 = vmatprep.subr.mxu0 0.0
  %214 = vmatpush2.msra.mxu0 0.0
  %215 = vmatprep.subr.mxu0 0.0
  %216 = vmatpush2.msra.mxu0 0.0
  %217 = vmatprep.mubr.f32.mxu0 0.0
  %218 = vmatmul.mubr.f32.gmra.mxu0 %v78
  %v219 = vpop.f32.mrf.mxu0
  %v220 = vadd.f32 0.0, %v219
  %v221 = vpop.f32.mrf.mxu0
  %222 = vdwg.mxu0
  %v223 = vadd.f32 %v79, %v149
  %v224 = vxor.u32 %v223, 2147483648
  %v225 = vmul.f32 %v224, 1.442695
  %v226 = vpow.pop %v225
  %v227 = vadd.f32 %v226, 1.0
  %v228 = vrcp.pop %v227
  %v229 = vmul.f32 1.0, %v228
  %v230 = vadd.f32 %v80, %v151
  %v231 = vxor.u32 %v230, 2147483648
  %v232 = vmul.f32 %v231, 1.442695
  %v233 = vpow.pop %v232
  %v234 = vadd.f32 %v233, 1.0
  %v235 = vrcp.pop %v234
  %v236 = vmul.f32 1.0, %v235
  %v237 = vadd.f32 %v220, %v76
  %v238 = vmul.f32 %v229, %v237
  %v239 = vadd.f32 %v81, %v238
  %v240 = vtanh.pop %v239
  %v241 = vsub.f32 1.0, %v236
  %v242 = vmul.f32 %v241, %v240
  %v243 = vmul.f32 %v236, %v78
  %v244 = vadd.f32 %v242, %v243
  %245 = vst [vmem:[%s4] sm:$0xff] %v244
  %s246 = scalar_lea.vmem %s0, 24
  %v247 = vld [vmem:[%s246] sm:$0xff]
  %v248 = vld [vmem:[%s246 + $0x8] sm:$0xff]
  %v249 = vld [vmem:[%s246 + $0x10] sm:$0xff]
  %250 = vmatprep.subr.mxu0 %v69
  %251 = vmatpush1.msra.mxu0 %v68
  %252 = vmatprep.subr.mxu0 %v66
  %253 = vmatpush1.msra.mxu0 %v65
  %254 = vmatprep.subr.mxu0 %v63
  %255 = vmatpush1.msra.mxu0 %v62
  %256 = vmatprep.subr.mxu0 %v60
  %257 = vmatpush1.msra.mxu0 %v59
  %258 = vmatprep.subr.mxu0 %v57
  %259 = vmatpush1.msra.mxu0 %v56
  %260 = vmatprep.subr.mxu0 %v54
  %261 = vmatpush1.msra.mxu0 %v53
  %262 = vmatprep.subr.mxu0 %v51
  %263 = vmatpush1.msra.mxu0 %v50
  %264 = vmatprep.subr.mxu0 %v48
  %265 = vmatpush1.msra.mxu0 %v47
  %266 = vmatprep.subr.mxu0 %v45
  %267 = vmatpush1.msra.mxu0 %v44
  %268 = vmatprep.subr.mxu0 %v42
  %269 = vmatpush1.msra.mxu0 %v41
  %270 = vmatprep.subr.mxu0 %v39
  %271 = vmatpush1.msra.mxu0 %v38
  %272 = vmatprep.subr.mxu0 %v36
  %273 = vmatpush1.msra.mxu0 %v35
  %274 = vmatprep.subr.mxu0 %v33
  %275 = vmatpush1.msra.mxu0 %v32
  %276 = vmatprep.subr.mxu0 %v30
  %277 = vmatpush1.msra.mxu0 %v29
  %278 = vmatprep.subr.mxu0 %v27
  %279 = vmatpush1.msra.mxu0 %v26
  %280 = vmatprep.subr.mxu0 %v24
  %281 = vmatpush1.msra.mxu0 %v23
  %282 = vmatprep.subr.mxu0 0.0
  %283 = vmatpush2.msra.mxu0 0.0
  %284 = vmatprep.subr.mxu0 0.0
  %285 = vmatpush2.msra.mxu0 0.0
  %286 = vmatprep.subr.mxu0 0.0
  %287 = vmatpush2.msra.mxu0 0.0
  %288 = vmatprep.subr.mxu0 0.0
  %289 = vmatpush2.msra.mxu0 0.0
  %290 = vmatprep.subr.mxu0 0.0
  %291 = vmatpush2.msra.mxu0 0.0
  %292 = vmatprep.subr.mxu0 0.0
  %293 = vmatpush2.msra.mxu0 0.0
  %294 = vmatprep.subr.mxu0 0.0
  %295 = vmatpush2.msra.mxu0 0.0
  %296 = vmatprep.subr.mxu0 0.0
  %297 = vmatpush2.msra.mxu0 0.0
  %298 = vmatprep.subr.mxu0 0.0
  %299 = vmatpush2.msra.mxu0 0.0
  %300 = vmatprep.subr.mxu0 0.0
  %301 = vmatpush2.msra.mxu0 0.0
  %302 = vmatprep.subr.mxu0 0.0
  %303 = vmatpush2.msra.mxu0 0.0
  %304 = vmatprep.subr.mxu0 0.0
  %305 = vmatpush2.msra.mxu0 0.0
  %306 = vmatprep.subr.mxu0 0.0
  %307 = vmatpush2.msra.mxu0 0.0
  %308 = vmatprep.subr.mxu0 0.0
  %309 = vmatpush2.msra.mxu0 0.0
  %310 = vmatprep.subr.mxu0 0.0
  %311 = vmatpush2.msra.mxu0 0.0
  %312 = vmatprep.subr.mxu0 0.0
  %313 = vmatpush2.msra.mxu0 0.0
  %314 = vmatprep.mubr.f32.mxu0 0.0
  %315 = vmatmul.mubr.f32.gmra.mxu0 %v244
  %v316 = vpop.f32.mrf.mxu0
  %v317 = vadd.f32 0.0, %v316
  %v318 = vpop.f32.mrf.mxu0
  %v319 = vadd.f32 0.0, %v318
  %320 = vdwg.mxu0
  %321 = vmatprep.subr.mxu0 0.0
  %322 = vmatpush1.msra.mxu0 %v70
  %323 = vmatprep.subr.mxu0 0.0
  %324 = vmatpush1.msra.mxu0 %v67
  %325 = vmatprep.subr.mxu0 0.0
  %326 = vmatpush1.msra.mxu0 %v64
  %327 = vmatprep.subr.mxu0 0.0
  %328 = vmatpush1.msra.mxu0 %v61
  %329 = vmatprep.subr.mxu0 0.0
  %330 = vmatpush1.msra.mxu0 %v58
  %331 = vmatprep.subr.mxu0 0.0
  %332 = vmatpush1.msra.mxu0 %v55
  %333 = vmatprep.subr.mxu0 0.0
  %334 = vmatpush1.msra.mxu0 %v52
  %335 = vmatprep.subr.mxu0 0.0
  %336 = vmatpush1.msra.mxu0 %v49
  %337 = vmatprep.subr.mxu0 0.0
  %338 = vmatpush1.msra.mxu0 %v46
  %339 = vmatprep.subr.mxu0 0.0
  %340 = vmatpush1.msra.mxu0 %v43
  %341 = vmatprep.subr.mxu0 0.0
  %342 = vmatpush1.msra.mxu0 %v40
  %343 = vmatprep.subr.mxu0 0.0
  %344 = vmatpush1.msra.mxu0 %v37
  %345 = vmatprep.subr.mxu0 0.0
  %346 = vmatpush1.msra.mxu0 %v34
  %347 = vmatprep.subr.mxu0 0.0
  %348 = vmatpush1.msra.mxu0 %v31
  %349 = vmatprep.subr.mxu0 0.0
  %350 = vmatpush1.msra.mxu0 %v28
  %351 = vmatprep.subr.mxu0 0.0
  %352 = vmatpush1.msra.mxu0 %v25
  %353 = vmatprep.subr.mxu0 0.0
  %354 = vmatpush2.msra.mxu0 0.0
  %355 = vmatprep.subr.mxu0 0.0
  %356 = vmatpush2.msra.mxu0 0.0
  %357 = vmatprep.subr.mxu0 0.0
  %358 = vmatpush2.msra.mxu0 0.0
  %359 = vmatprep.subr.mxu0 0.0
  %360 = vmatpush2.msra.mxu0 0.0
  %361 = vmatprep.subr.mxu0 0.0
  %362 = vmatpush2.msra.mxu0 0.0
  %363 = vmatprep.subr.mxu0 0.0
  %364 = vmatpush2.msra.mxu0 0.0
  %365 = vmatprep.subr.mxu0 0.0
  %366 = vmatpush2.msra.mxu0 0.0
  %367 = vmatprep.subr.mxu0 0.0
  %368 = vmatpush2.msra.mxu0 0.0
  %369 = vmatprep.subr.mxu0 0.0
  %370 = vmatpush2.msra.mxu0 0.0
  %371 = vmatprep.subr.mxu0 0.0
  %372 = vmatpush2.msra.mxu0 0.0
  %373 = vmatprep.subr.mxu0 0.0
  %374 = vmatpush2.msra.mxu0 0.0
  %375 = vmatprep.subr.mxu0 0.0
  %376 = vmatpush2.msra.mxu0 0.0
  %377 = vmatprep.subr.mxu0 0.0
  %378 = vmatpush2.msra.mxu0 0.0
  %379 = vmatprep.subr.mxu0 0.0
  %380 = vmatpush2.msra.mxu0 0.0
  %381 = vmatprep.subr.mxu0 0.0
  %382 = vmatpush2.msra.mxu0 0.0
  %383 = vmatprep.subr.mxu0 0.0
  %384 = vmatpush2.msra.mxu0 0.0
  %385 = vmatprep.mubr.f32.mxu0 0.0
  %386 = vmatmul.mubr.f32.gmra.mxu0 %v244
  %v387 = vpop.f32.mrf.mxu0
  %v388 = vadd.f32 0.0, %v387
  %v389 = vpop.f32.mrf.mxu0
  %390 = vdwg.mxu0
  %v391 = vadd.f32 %v247, %v317
  %v392 = vxor.u32 %v391, 2147483648
  %v393 = vmul.f32 %v392, 1.442695
  %v394 = vpow.pop %v393
  %v395 = vadd.f32 %v394, 1.0
  %v396 = vrcp.pop %v395
  %v397 = vmul.f32 1.0, %v396
  %v398 = vadd.f32 %v248, %v319
  %v399 = vxor.u32 %v398, 2147483648
  %v400 = vmul.f32 %v399, 1.442695
  %v401 = vpow.pop %v400
  %v402 = vadd.f32 %v401, 1.0
  %v403 = vrcp.pop %v402
  %v404 = vmul.f32 1.0, %v403
  %v405 = vadd.f32 %v388, %v76
  %v406 = vmul.f32 %v397, %v405
  %v407 = vadd.f32 %v249, %v406
  %v408 = vtanh.pop %v407
  %v409 = vsub.f32 1.0, %v404
  %v410 = vmul.f32 %v409, %v408
  %v411 = vmul.f32 %v404, %v244
  %v412 = vadd.f32 %v410, %v411
  %s413 = scalar_lea.vmem %s4, 8
  %414 = vst [vmem:[%s413] sm:$0xff] %v412
  %s415 = scalar_lea.vmem %s0, 48
  %v416 = vld [vmem:[%s415] sm:$0xff]
  %v417 = vld [vmem:[%s415 + $0x8] sm:$0xff]
  %v418 = vld [vmem:[%s415 + $0x10] sm:$0xff]
  %419 = vmatprep.subr.mxu0 %v69
  %420 = vmatpush1.msra.mxu0 %v68
  %421 = vmatprep.subr.mxu0 %v66
  %422 = vmatpush1.msra.mxu0 %v65
  %423 = vmatprep.subr.mxu0 %v63
  %424 = vmatpush1.msra.mxu0 %v62
  %425 = vmatprep.subr.mxu0 %v60
  %426 = vmatpush1.msra.mxu0 %v59
  %427 = vmatprep.subr.mxu0 %v57
  %428 = vmatpush1.msra.mxu0 %v56
  %429 = vmatprep.subr.mxu0 %v54
  %430 = vmatpush1.msra.mxu0 %v53
  %431 = vmatprep.subr.mxu0 %v51
  %432 = vmatpush1.msra.mxu0 %v50
  %433 = vmatprep.subr.mxu0 %v48
  %434 = vmatpush1.msra.mxu0 %v47
  %435 = vmatprep.subr.mxu0 %v45
  %436 = vmatpush1.msra.mxu0 %v44
  %437 = vmatprep.subr.mxu0 %v42
  %438 = vmatpush1.msra.mxu0 %v41
  %439 = vmatprep.subr.mxu0 %v39
  %440 = vmatpush1.msra.mxu0 %v38
  %441 = vmatprep.subr.mxu0 %v36
  %442 = vmatpush1.msra.mxu0 %v35
  %443 = vmatprep.subr.mxu0 %v33
  %444 = vmatpush1.msra.mxu0 %v32
  %445 = vmatprep.subr.mxu0 %v30
  %446 = vmatpush1.msra.mxu0 %v29
  %447 = vmatprep.subr.mxu0 %v27
  %448 = vmatpush1.msra.mxu0 %v26
  %449 = vmatprep.subr.mxu0 %v24
  %450 = vmatpush1.msra.mxu0 %v23
  %451 = vmatprep.subr.mxu0 0.0
  %452 = vmatpush2.msra.mxu0 0.0
  %453 = vmatprep.subr.mxu0 0.0
  %454 = vmatpush2.msra.mxu0 0.0
  %455 = vmatprep.subr.mxu0 0.0
  %456 = vmatpush2.msra.mxu0 0.0
  %457 = vmatprep.subr.mxu0 0.0
  %458 = vmatpush2.msra.mxu0 0.0
  %459 = vmatprep.subr.mxu0 0.0
  %460 = vmatpush2.msra.mxu0 0.0
  %461 = vmatprep.subr.mxu0 0.0
  %462 = vmatpush2.msra.mxu0 0.0
  %463 = vmatprep.subr.mxu0 0.0
  %464 = vmatpush2.msra.mxu0 0.0
  %465 = vmatprep.subr.mxu0 0.0
  %466 = vmatpush2.msra.mxu0 0.0
  %467 = vmatprep.subr.mxu0 0.0
  %468 = vmatpush2.msra.mxu0 0.0
  %469 = vmatprep.subr.mxu0 0.0
  %470 = vmatpush2.msra.mxu0 0.0
  %471 = vmatprep.subr.mxu0 0.0
  %472 = vmatpush2.msra.mxu0 0.0
  %473 = vmatprep.subr.mxu0 0.0
  %474 = vmatpush2.msra.mxu0 0.0
  %475 = vmatprep.subr.mxu0 0.0
  %476 = vmatpush2.msra.mxu0 0.0
  %477 = vmatprep.subr.mxu0 0.0
  %478 = vmatpush2.msra.mxu0 0.0
  %479 = vmatprep.subr.mxu0 0.0
  %480 = vmatpush2.msra.mxu0 0.0
  %481 = vmatprep.subr.mxu0 0.0
  %482 = vmatpush2.msra.mxu0 0.0
  %483 = vmatprep.mubr.f32.mxu0 0.0
  %484 = vmatmul.mubr.f32.gmra.mxu0 %v412
  %v485 = vpop.f32.mrf.mxu0
  %v486 = vadd.f32 0.0, %v485
  %v487 = vpop.f32.mrf.mxu0
  %v488 = vadd.f32 0.0, %v487
  %489 = vdwg.mxu0
  %490 = vmatprep.subr.mxu0 0.0
  %491 = vmatpush1.msra.mxu0 %v70
  %492 = vmatprep.subr.mxu0 0.0
  %493 = vmatpush1.msra.mxu0 %v67
  %494 = vmatprep.subr.mxu0 0.0
  %495 = vmatpush1.msra.mxu0 %v64
  %496 = vmatprep.subr.mxu0 0.0
  %497 = vmatpush1.msra.mxu0 %v61
  %498 = vmatprep.subr.mxu0 0.0
  %499 = vmatpush1.msra.mxu0 %v58
  %500 = vmatprep.subr.mxu0 0.0
  %501 = vmatpush1.msra.mxu0 %v55
  %502 = vmatprep.subr.mxu0 0.0
  %503 = vmatpush1.msra.mxu0 %v52
  %504 = vmatprep.subr.mxu0 0.0
  %505 = vmatpush1.msra.mxu0 %v49
  %506 = vmatprep.subr.mxu0 0.0
  %507 = vmatpush1.msra.mxu0 %v46
  %508 = vmatprep.subr.mxu0 0.0
  %509 = vmatpush1.msra.mxu0 %v43
  %510 = vmatprep.subr.mxu0 0.0
  %511 = vmatpush1.msra.mxu0 %v40
  %512 = vmatprep.subr.mxu0 0.0
  %513 = vmatpush1.msra.mxu0 %v37
  %514 = vmatprep.subr.mxu0 0.0
  %515 = vmatpush1.msra.mxu0 %v34
  %516 = vmatprep.subr.mxu0 0.0
  %517 = vmatpush1.msra.mxu0 %v31
  %518 = vmatprep.subr.mxu0 0.0
  %519 = vmatpush1.msra.mxu0 %v28
  %520 = vmatprep.subr.mxu0 0.0
  %521 = vmatpush1.msra.mxu0 %v25
  %522 = vmatprep.subr.mxu0 0.0
  %523 = vmatpush2.msra.mxu0 0.0
  %524 = vmatprep.subr.mxu0 0.0
  %525 = vmatpush2.msra.mxu0 0.0
  %526 = vmatprep.subr.mxu0 0.0
  %527 = vmatpush2.msra.mxu0 0.0
  %528 = vmatprep.subr.mxu0 0.0
  %529 = vmatpush2.msra.mxu0 0.0
  %530 = vmatprep.subr.mxu0 0.0
  %531 = vmatpush2.msra.mxu0 0.0
  %532 = vmatprep.subr.mxu0 0.0
  %533 = vmatpush2.msra.mxu0 0.0
  %534 = vmatprep.subr.mxu0 0.0
  %535 = vmatpush2.msra.mxu0 0.0
  %536 = vmatprep.subr.mxu0 0.0
  %537 = vmatpush2.msra.mxu0 0.0
  %538 = vmatprep.subr.mxu0 0.0
  %539 = vmatpush2.msra.mxu0 0.0
  %540 = vmatprep.subr.mxu0 0.0
  %541 = vmatpush2.msra.mxu0 0.0
  %542 = vmatprep.subr.mxu0 0.0
  %543 = vmatpush2.msra.mxu0 0.0
  %544 = vmatprep.subr.mxu0 0.0
  %545 = vmatpush2.msra.mxu0 0.0
  %546 = vmatprep.subr.mxu0 0.0
  %547 = vmatpush2.msra.mxu0 0.0
  %548 = vmatprep.subr.mxu0 0.0
  %549 = vmatpush2.msra.mxu0 0.0
  %550 = vmatprep.subr.mxu0 0.0
  %551 = vmatpush2.msra.mxu0 0.0
  %552 = vmatprep.subr.mxu0 0.0
  %553 = vmatpush2.msra.mxu0 0.0
  %554 = vmatprep.mubr.f32.mxu0 0.0
  %555 = vmatmul.mubr.f32.gmra.mxu0 %v412
  %v556 = vpop.f32.mrf.mxu0
  %v557 = vadd.f32 0.0, %v556
  %v558 = vpop.f32.mrf.mxu0
  %559 = vdwg.mxu0
  %v560 = vadd.f32 %v416, %v486
  %v561 = vxor.u32 %v560, 2147483648
  %v562 = vmul.f32 %v561, 1.442695
  %v563 = vpow.pop %v562
  %v564 = vadd.f32 %v563, 1.0
  %v565 = vrcp.pop %v564
  %v566 = vmul.f32 1.0, %v565
  %v567 = vadd.f32 %v417, %v488
  %v568 = vxor.u32 %v567, 2147483648
  %v569 = vmul.f32 %v568, 1.442695
  %v570 = vpow.pop %v569
  %v571 = vadd.f32 %v570, 1.0
  %v572 = vrcp.pop %v571
  %v573 = vmul.f32 1.0, %v572
  %v574 = vadd.f32 %v557, %v76
  %v575 = vmul.f32 %v566, %v574
  %v576 = vadd.f32 %v418, %v575
  %v577 = vtanh.pop %v576
  %v578 = vsub.f32 1.0, %v573
  %v579 = vmul.f32 %v578, %v577
  %v580 = vmul.f32 %v573, %v412
  %v581 = vadd.f32 %v579, %v580
  %s582 = scalar_lea.vmem %s4, 16
  %583 = vst [vmem:[%s582] sm:$0xff] %v581
  %s584 = scalar_lea.vmem %s0, 72
  %v585 = vld [vmem:[%s584] sm:$0xff]
  %v586 = vld [vmem:[%s584 + $0x8] sm:$0xff]
  %v587 = vld [vmem:[%s584 + $0x10] sm:$0xff]
  %588 = vmatprep.subr.mxu0 %v69
  %589 = vmatpush1.msra.mxu0 %v68
  %590 = vmatprep.subr.mxu0 %v66
  %591 = vmatpush1.msra.mxu0 %v65
  %592 = vmatprep.subr.mxu0 %v63
  %593 = vmatpush1.msra.mxu0 %v62
  %594 = vmatprep.subr.mxu0 %v60
  %595 = vmatpush1.msra.mxu0 %v59
  %596 = vmatprep.subr.mxu0 %v57
  %597 = vmatpush1.msra.mxu0 %v56
  %598 = vmatprep.subr.mxu0 %v54
  %599 = vmatpush1.msra.mxu0 %v53
  %600 = vmatprep.subr.mxu0 %v51
  %601 = vmatpush1.msra.mxu0 %v50
  %602 = vmatprep.subr.mxu0 %v48
  %603 = vmatpush1.msra.mxu0 %v47
  %604 = vmatprep.subr.mxu0 %v45
  %605 = vmatpush1.msra.mxu0 %v44
  %606 = vmatprep.subr.mxu0 %v42
  %607 = vmatpush1.msra.mxu0 %v41
  %608 = vmatprep.subr.mxu0 %v39
  %609 = vmatpush1.msra.mxu0 %v38
  %610 = vmatprep.subr.mxu0 %v36
  %611 = vmatpush1.msra.mxu0 %v35
  %612 = vmatprep.subr.mxu0 %v33
  %613 = vmatpush1.msra.mxu0 %v32
  %614 = vmatprep.subr.mxu0 %v30
  %615 = vmatpush1.msra.mxu0 %v29
  %616 = vmatprep.subr.mxu0 %v27
  %617 = vmatpush1.msra.mxu0 %v26
  %618 = vmatprep.subr.mxu0 %v24
  %619 = vmatpush1.msra.mxu0 %v23
  %620 = vmatprep.subr.mxu0 0.0
  %621 = vmatpush2.msra.mxu0 0.0
  %622 = vmatprep.subr.mxu0 0.0
  %623 = vmatpush2.msra.mxu0 0.0
  %624 = vmatprep.subr.mxu0 0.0
  %625 = vmatpush2.msra.mxu0 0.0
  %626 = vmatprep.subr.mxu0 0.0
  %627 = vmatpush2.msra.mxu0 0.0
  %628 = vmatprep.subr.mxu0 0.0
  %629 = vmatpush2.msra.mxu0 0.0
  %630 = vmatprep.subr.mxu0 0.0
  %631 = vmatpush2.msra.mxu0 0.0
  %632 = vmatprep.subr.mxu0 0.0
  %633 = vmatpush2.msra.mxu0 0.0
  %634 = vmatprep.subr.mxu0 0.0
  %635 = vmatpush2.msra.mxu0 0.0
  %636 = vmatprep.subr.mxu0 0.0
  %637 = vmatpush2.msra.mxu0 0.0
  %638 = vmatprep.subr.mxu0 0.0
  %639 = vmatpush2.msra.mxu0 0.0
  %640 = vmatprep.subr.mxu0 0.0
  %641 = vmatpush2.msra.mxu0 0.0
  %642 = vmatprep.subr.mxu0 0.0
  %643 = vmatpush2.msra.mxu0 0.0
  %644 = vmatprep.subr.mxu0 0.0
  %645 = vmatpush2.msra.mxu0 0.0
  %646 = vmatprep.subr.mxu0 0.0
  %647 = vmatpush2.msra.mxu0 0.0
  %648 = vmatprep.subr.mxu0 0.0
  %649 = vmatpush2.msra.mxu0 0.0
  %650 = vmatprep.subr.mxu0 0.0
  %651 = vmatpush2.msra.mxu0 0.0
  %652 = vmatprep.mubr.f32.mxu0 0.0
  %653 = vmatmul.mubr.f32.gmra.mxu0 %v581
  %v654 = vpop.f32.mrf.mxu0
  %v655 = vadd.f32 0.0, %v654
  %v656 = vpop.f32.mrf.mxu0
  %v657 = vadd.f32 0.0, %v656
  %658 = vdwg.mxu0
  %659 = vmatprep.subr.mxu0 0.0
  %660 = vmatpush1.msra.mxu0 %v70
  %661 = vmatprep.subr.mxu0 0.0
  %662 = vmatpush1.msra.mxu0 %v67
  %663 = vmatprep.subr.mxu0 0.0
  %664 = vmatpush1.msra.mxu0 %v64
  %665 = vmatprep.subr.mxu0 0.0
  %666 = vmatpush1.msra.mxu0 %v61
  %667 = vmatprep.subr.mxu0 0.0
  %668 = vmatpush1.msra.mxu0 %v58
  %669 = vmatprep.subr.mxu0 0.0
  %670 = vmatpush1.msra.mxu0 %v55
  %671 = vmatprep.subr.mxu0 0.0
  %672 = vmatpush1.msra.mxu0 %v52
  %673 = vmatprep.subr.mxu0 0.0
  %674 = vmatpush1.msra.mxu0 %v49
  %675 = vmatprep.subr.mxu0 0.0
  %676 = vmatpush1.msra.mxu0 %v46
  %677 = vmatprep.subr.mxu0 0.0
  %678 = vmatpush1.msra.mxu0 %v43
  %679 = vmatprep.subr.mxu0 0.0
  %680 = vmatpush1.msra.mxu0 %v40
  %681 = vmatprep.subr.mxu0 0.0
  %682 = vmatpush1.msra.mxu0 %v37
  %683 = vmatprep.subr.mxu0 0.0
  %684 = vmatpush1.msra.mxu0 %v34
  %685 = vmatprep.subr.mxu0 0.0
  %686 = vmatpush1.msra.mxu0 %v31
  %687 = vmatprep.subr.mxu0 0.0
  %688 = vmatpush1.msra.mxu0 %v28
  %689 = vmatprep.subr.mxu0 0.0
  %690 = vmatpush1.msra.mxu0 %v25
  %691 = vmatprep.subr.mxu0 0.0
  %692 = vmatpush2.msra.mxu0 0.0
  %693 = vmatprep.subr.mxu0 0.0
  %694 = vmatpush2.msra.mxu0 0.0
  %695 = vmatprep.subr.mxu0 0.0
  %696 = vmatpush2.msra.mxu0 0.0
  %697 = vmatprep.subr.mxu0 0.0
  %698 = vmatpush2.msra.mxu0 0.0
  %699 = vmatprep.subr.mxu0 0.0
  %700 = vmatpush2.msra.mxu0 0.0
  %701 = vmatprep.subr.mxu0 0.0
  %702 = vmatpush2.msra.mxu0 0.0
  %703 = vmatprep.subr.mxu0 0.0
  %704 = vmatpush2.msra.mxu0 0.0
  %705 = vmatprep.subr.mxu0 0.0
  %706 = vmatpush2.msra.mxu0 0.0
  %707 = vmatprep.subr.mxu0 0.0
  %708 = vmatpush2.msra.mxu0 0.0
  %709 = vmatprep.subr.mxu0 0.0
  %710 = vmatpush2.msra.mxu0 0.0
  %711 = vmatprep.subr.mxu0 0.0
  %712 = vmatpush2.msra.mxu0 0.0
  %713 = vmatprep.subr.mxu0 0.0
  %714 = vmatpush2.msra.mxu0 0.0
  %715 = vmatprep.subr.mxu0 0.0
  %716 = vmatpush2.msra.mxu0 0.0
  %717 = vmatprep.subr.mxu0 0.0
  %718 = vmatpush2.msra.mxu0 0.0
  %719 = vmatprep.subr.mxu0 0.0
  %720 = vmatpush2.msra.mxu0 0.0
  %721 = vmatprep.subr.mxu0 0.0
  %722 = vmatpush2.msra.mxu0 0.0
  %723 = vmatprep.mubr.f32.mxu0 0.0
  %724 = vmatmul.mubr.f32.gmra.mxu0 %v581
  %v725 = vpop.f32.mrf.mxu0
  %v726 = vadd.f32 0.0, %v725
  %v727 = vpop.f32.mrf.mxu0
  %728 = vdwg.mxu0
  %v729 = vadd.f32 %v585, %v655
  %v730 = vxor.u32 %v729, 2147483648
  %v731 = vmul.f32 %v730, 1.442695
  %v732 = vpow.pop %v731
  %v733 = vadd.f32 %v732, 1.0
  %v734 = vrcp.pop %v733
  %v735 = vmul.f32 1.0, %v734
  %v736 = vadd.f32 %v586, %v657
  %v737 = vxor.u32 %v736, 2147483648
  %v738 = vmul.f32 %v737, 1.442695
  %v739 = vpow.pop %v738
  %v740 = vadd.f32 %v739, 1.0
  %v741 = vrcp.pop %v740
  %v742 = vmul.f32 1.0, %v741
  %v743 = vadd.f32 %v726, %v76
  %v744 = vmul.f32 %v735, %v743
  %v745 = vadd.f32 %v587, %v744
  %v746 = vtanh.pop %v745
  %v747 = vsub.f32 1.0, %v742
  %v748 = vmul.f32 %v747, %v746
  %v749 = vmul.f32 %v742, %v581
  %v750 = vadd.f32 %v748, %v749
  %s751 = scalar_lea.vmem %s4, 24
  %752 = vst [vmem:[%s751] sm:$0xff] %v750
  %s753 = scalar_lea.vmem %s0, 96
  %v754 = vld [vmem:[%s753] sm:$0xff]
  %v755 = vld [vmem:[%s753 + $0x8] sm:$0xff]
  %v756 = vld [vmem:[%s753 + $0x10] sm:$0xff]
  %757 = vmatprep.subr.mxu0 %v69
  %758 = vmatpush1.msra.mxu0 %v68
  %759 = vmatprep.subr.mxu0 %v66
  %760 = vmatpush1.msra.mxu0 %v65
  %761 = vmatprep.subr.mxu0 %v63
  %762 = vmatpush1.msra.mxu0 %v62
  %763 = vmatprep.subr.mxu0 %v60
  %764 = vmatpush1.msra.mxu0 %v59
  %765 = vmatprep.subr.mxu0 %v57
  %766 = vmatpush1.msra.mxu0 %v56
  %767 = vmatprep.subr.mxu0 %v54
  %768 = vmatpush1.msra.mxu0 %v53
  %769 = vmatprep.subr.mxu0 %v51
  %770 = vmatpush1.msra.mxu0 %v50
  %771 = vmatprep.subr.mxu0 %v48
  %772 = vmatpush1.msra.mxu0 %v47
  %773 = vmatprep.subr.mxu0 %v45
  %774 = vmatpush1.msra.mxu0 %v44
  %775 = vmatprep.subr.mxu0 %v42
  %776 = vmatpush1.msra.mxu0 %v41
  %777 = vmatprep.subr.mxu0 %v39
  %778 = vmatpush1.msra.mxu0 %v38
  %779 = vmatprep.subr.mxu0 %v36
  %780 = vmatpush1.msra.mxu0 %v35
  %781 = vmatprep.subr.mxu0 %v33
  %782 = vmatpush1.msra.mxu0 %v32
  %783 = vmatprep.subr.mxu0 %v30
  %784 = vmatpush1.msra.mxu0 %v29
  %785 = vmatprep.subr.mxu0 %v27
  %786 = vmatpush1.msra.mxu0 %v26
  %787 = vmatprep.subr.mxu0 %v24
  %788 = vmatpush1.msra.mxu0 %v23
  %789 = vmatprep.subr.mxu0 0.0
  %790 = vmatpush2.msra.mxu0 0.0
  %791 = vmatprep.subr.mxu0 0.0
  %792 = vmatpush2.msra.mxu0 0.0
  %793 = vmatprep.subr.mxu0 0.0
  %794 = vmatpush2.msra.mxu0 0.0
  %795 = vmatprep.subr.mxu0 0.0
  %796 = vmatpush2.msra.mxu0 0.0
  %797 = vmatprep.subr.mxu0 0.0
  %798 = vmatpush2.msra.mxu0 0.0
  %799 = vmatprep.subr.mxu0 0.0
  %800 = vmatpush2.msra.mxu0 0.0
  %801 = vmatprep.subr.mxu0 0.0
  %802 = vmatpush2.msra.mxu0 0.0
  %803 = vmatprep.subr.mxu0 0.0
  %804 = vmatpush2.msra.mxu0 0.0
  %805 = vmatprep.subr.mxu0 0.0
  %806 = vmatpush2.msra.mxu0 0.0
  %807 = vmatprep.subr.mxu0 0.0
  %808 = vmatpush2.msra.mxu0 0.0
  %809 = vmatprep.subr.mxu0 0.0
  %810 = vmatpush2.msra.mxu0 0.0
  %811 = vmatprep.subr.mxu0 0.0
  %812 = vmatpush2.msra.mxu0 0.0
  %813 = vmatprep.subr.mxu0 0.0
  %814 = vmatpush2.msra.mxu0 0.0
  %815 = vmatprep.subr.mxu0 0.0
  %816 = vmatpush2.msra.mxu0 0.0
  %817 = vmatprep.subr.mxu0 0.0
  %818 = vmatpush2.msra.mxu0 0.0
  %819 = vmatprep.subr.mxu0 0.0
  %820 = vmatpush2.msra.mxu0 0.0
  %821 = vmatprep.mubr.f32.mxu0 0.0
  %822 = vmatmul.mubr.f32.gmra.mxu0 %v750
  %v823 = vpop.f32.mrf.mxu0
  %v824 = vadd.f32 0.0, %v823
  %v825 = vpop.f32.mrf.mxu0
  %v826 = vadd.f32 0.0, %v825
  %827 = vdwg.mxu0
  %828 = vmatprep.subr.mxu0 0.0
  %829 = vmatpush1.msra.mxu0 %v70
  %830 = vmatprep.subr.mxu0 0.0
  %831 = vmatpush1.msra.mxu0 %v67
  %832 = vmatprep.subr.mxu0 0.0
  %833 = vmatpush1.msra.mxu0 %v64
  %834 = vmatprep.subr.mxu0 0.0
  %835 = vmatpush1.msra.mxu0 %v61
  %836 = vmatprep.subr.mxu0 0.0
  %837 = vmatpush1.msra.mxu0 %v58
  %838 = vmatprep.subr.mxu0 0.0
  %839 = vmatpush1.msra.mxu0 %v55
  %840 = vmatprep.subr.mxu0 0.0
  %841 = vmatpush1.msra.mxu0 %v52
  %842 = vmatprep.subr.mxu0 0.0
  %843 = vmatpush1.msra.mxu0 %v49
  %844 = vmatprep.subr.mxu0 0.0
  %845 = vmatpush1.msra.mxu0 %v46
  %846 = vmatprep.subr.mxu0 0.0
  %847 = vmatpush1.msra.mxu0 %v43
  %848 = vmatprep.subr.mxu0 0.0
  %849 = vmatpush1.msra.mxu0 %v40
  %850 = vmatprep.subr.mxu0 0.0
  %851 = vmatpush1.msra.mxu0 %v37
  %852 = vmatprep.subr.mxu0 0.0
  %853 = vmatpush1.msra.mxu0 %v34
  %854 = vmatprep.subr.mxu0 0.0
  %855 = vmatpush1.msra.mxu0 %v31
  %856 = vmatprep.subr.mxu0 0.0
  %857 = vmatpush1.msra.mxu0 %v28
  %858 = vmatprep.subr.mxu0 0.0
  %859 = vmatpush1.msra.mxu0 %v25
  %860 = vmatprep.subr.mxu0 0.0
  %861 = vmatpush2.msra.mxu0 0.0
  %862 = vmatprep.subr.mxu0 0.0
  %863 = vmatpush2.msra.mxu0 0.0
  %864 = vmatprep.subr.mxu0 0.0
  %865 = vmatpush2.msra.mxu0 0.0
  %866 = vmatprep.subr.mxu0 0.0
  %867 = vmatpush2.msra.mxu0 0.0
  %868 = vmatprep.subr.mxu0 0.0
  %869 = vmatpush2.msra.mxu0 0.0
  %870 = vmatprep.subr.mxu0 0.0
  %871 = vmatpush2.msra.mxu0 0.0
  %872 = vmatprep.subr.mxu0 0.0
  %873 = vmatpush2.msra.mxu0 0.0
  %874 = vmatprep.subr.mxu0 0.0
  %875 = vmatpush2.msra.mxu0 0.0
  %876 = vmatprep.subr.mxu0 0.0
  %877 = vmatpush2.msra.mxu0 0.0
  %878 = vmatprep.subr.mxu0 0.0
  %879 = vmatpush2.msra.mxu0 0.0
  %880 = vmatprep.subr.mxu0 0.0
  %881 = vmatpush2.msra.mxu0 0.0
  %882 = vmatprep.subr.mxu0 0.0
  %883 = vmatpush2.msra.mxu0 0.0
  %884 = vmatprep.subr.mxu0 0.0
  %885 = vmatpush2.msra.mxu0 0.0
  %886 = vmatprep.subr.mxu0 0.0
  %887 = vmatpush2.msra.mxu0 0.0
  %888 = vmatprep.subr.mxu0 0.0
  %889 = vmatpush2.msra.mxu0 0.0
  %890 = vmatprep.subr.mxu0 0.0
  %891 = vmatpush2.msra.mxu0 0.0
  %892 = vmatprep.mubr.f32.mxu0 0.0
  %893 = vmatmul.mubr.f32.gmra.mxu0 %v750
  %v894 = vpop.f32.mrf.mxu0
  %v895 = vadd.f32 0.0, %v894
  %v896 = vpop.f32.mrf.mxu0
  %897 = vdwg.mxu0
  %v898 = vadd.f32 %v754, %v824
  %v899 = vxor.u32 %v898, 2147483648
  %v900 = vmul.f32 %v899, 1.442695
  %v901 = vpow.pop %v900
  %v902 = vadd.f32 %v901, 1.0
  %v903 = vrcp.pop %v902
  %v904 = vmul.f32 1.0, %v903
  %v905 = vadd.f32 %v755, %v826
  %v906 = vxor.u32 %v905, 2147483648
  %v907 = vmul.f32 %v906, 1.442695
  %v908 = vpow.pop %v907
  %v909 = vadd.f32 %v908, 1.0
  %v910 = vrcp.pop %v909
  %v911 = vmul.f32 1.0, %v910
  %v912 = vadd.f32 %v895, %v76
  %v913 = vmul.f32 %v904, %v912
  %v914 = vadd.f32 %v756, %v913
  %v915 = vtanh.pop %v914
  %v916 = vsub.f32 1.0, %v911
  %v917 = vmul.f32 %v916, %v915
  %v918 = vmul.f32 %v911, %v750
  %v919 = vadd.f32 %v917, %v918
  %s920 = scalar_lea.vmem %s4, 32
  %921 = vst [vmem:[%s920] sm:$0xff] %v919
  %s922 = scalar_lea.vmem %s0, 120
  %v923 = vld [vmem:[%s922] sm:$0xff]
  %v924 = vld [vmem:[%s922 + $0x8] sm:$0xff]
  %v925 = vld [vmem:[%s922 + $0x10] sm:$0xff]
  %926 = vmatprep.subr.mxu0 %v69
  %927 = vmatpush1.msra.mxu0 %v68
  %928 = vmatprep.subr.mxu0 %v66
  %929 = vmatpush1.msra.mxu0 %v65
  %930 = vmatprep.subr.mxu0 %v63
  %931 = vmatpush1.msra.mxu0 %v62
  %932 = vmatprep.subr.mxu0 %v60
  %933 = vmatpush1.msra.mxu0 %v59
  %934 = vmatprep.subr.mxu0 %v57
  %935 = vmatpush1.msra.mxu0 %v56
  %936 = vmatprep.subr.mxu0 %v54
  %937 = vmatpush1.msra.mxu0 %v53
  %938 = vmatprep.subr.mxu0 %v51
  %939 = vmatpush1.msra.mxu0 %v50
  %940 = vmatprep.subr.mxu0 %v48
  %941 = vmatpush1.msra.mxu0 %v47
  %942 = vmatprep.subr.mxu0 %v45
  %943 = vmatpush1.msra.mxu0 %v44
  %944 = vmatprep.subr.mxu0 %v42
  %945 = vmatpush1.msra.mxu0 %v41
  %946 = vmatprep.subr.mxu0 %v39
  %947 = vmatpush1.msra.mxu0 %v38
  %948 = vmatprep.subr.mxu0 %v36
  %949 = vmatpush1.msra.mxu0 %v35
  %950 = vmatprep.subr.mxu0 %v33
  %951 = vmatpush1.msra.mxu0 %v32
  %952 = vmatprep.subr.mxu0 %v30
  %953 = vmatpush1.msra.mxu0 %v29
  %954 = vmatprep.subr.mxu0 %v27
  %955 = vmatpush1.msra.mxu0 %v26
  %956 = vmatprep.subr.mxu0 %v24
  %957 = vmatpush1.msra.mxu0 %v23
  %958 = vmatprep.subr.mxu0 0.0
  %959 = vmatpush2.msra.mxu0 0.0
  %960 = vmatprep.subr.mxu0 0.0
  %961 = vmatpush2.msra.mxu0 0.0
  %962 = vmatprep.subr.mxu0 0.0
  %963 = vmatpush2.msra.mxu0 0.0
  %964 = vmatprep.subr.mxu0 0.0
  %965 = vmatpush2.msra.mxu0 0.0
  %966 = vmatprep.subr.mxu0 0.0
  %967 = vmatpush2.msra.mxu0 0.0
  %968 = vmatprep.subr.mxu0 0.0
  %969 = vmatpush2.msra.mxu0 0.0
  %970 = vmatprep.subr.mxu0 0.0
  %971 = vmatpush2.msra.mxu0 0.0
  %972 = vmatprep.subr.mxu0 0.0
  %973 = vmatpush2.msra.mxu0 0.0
  %974 = vmatprep.subr.mxu0 0.0
  %975 = vmatpush2.msra.mxu0 0.0
  %976 = vmatprep.subr.mxu0 0.0
  %977 = vmatpush2.msra.mxu0 0.0
  %978 = vmatprep.subr.mxu0 0.0
  %979 = vmatpush2.msra.mxu0 0.0
  %980 = vmatprep.subr.mxu0 0.0
  %981 = vmatpush2.msra.mxu0 0.0
  %982 = vmatprep.subr.mxu0 0.0
  %983 = vmatpush2.msra.mxu0 0.0
  %984 = vmatprep.subr.mxu0 0.0
  %985 = vmatpush2.msra.mxu0 0.0
  %986 = vmatprep.subr.mxu0 0.0
  %987 = vmatpush2.msra.mxu0 0.0
  %988 = vmatprep.subr.mxu0 0.0
  %989 = vmatpush2.msra.mxu0 0.0
  %990 = vmatprep.mubr.f32.mxu0 0.0
  %991 = vmatmul.mubr.f32.gmra.mxu0 %v919
  %v992 = vpop.f32.mrf.mxu0
  %v993 = vadd.f32 0.0, %v992
  %v994 = vpop.f32.mrf.mxu0
  %v995 = vadd.f32 0.0, %v994
  %996 = vdwg.mxu0
  %997 = vmatprep.subr.mxu0 0.0
  %998 = vmatpush1.msra.mxu0 %v70
  %999 = vmatprep.subr.mxu0 0.0
  %1000 = vmatpush1.msra.mxu0 %v67
  %1001 = vmatprep.subr.mxu0 0.0
  %1002 = vmatpush1.msra.mxu0 %v64
  %1003 = vmatprep.subr.mxu0 0.0
  %1004 = vmatpush1.msra.mxu0 %v61
  %1005 = vmatprep.subr.mxu0 0.0
  %1006 = vmatpush1.msra.mxu0 %v58
  %1007 = vmatprep.subr.mxu0 0.0
  %1008 = vmatpush1.msra.mxu0 %v55
  %1009 = vmatprep.subr.mxu0 0.0
  %1010 = vmatpush1.msra.mxu0 %v52
  %1011 = vmatprep.subr.mxu0 0.0
  %1012 = vmatpush1.msra.mxu0 %v49
  %1013 = vmatprep.subr.mxu0 0.0
  %1014 = vmatpush1.msra.mxu0 %v46
  %1015 = vmatprep.subr.mxu0 0.0
  %1016 = vmatpush1.msra.mxu0 %v43
  %1017 = vmatprep.subr.mxu0 0.0
  %1018 = vmatpush1.msra.mxu0 %v40
  %1019 = vmatprep.subr.mxu0 0.0
  %1020 = vmatpush1.msra.mxu0 %v37
  %1021 = vmatprep.subr.mxu0 0.0
  %1022 = vmatpush1.msra.mxu0 %v34
  %1023 = vmatprep.subr.mxu0 0.0
  %1024 = vmatpush1.msra.mxu0 %v31
  %1025 = vmatprep.subr.mxu0 0.0
  %1026 = vmatpush1.msra.mxu0 %v28
  %1027 = vmatprep.subr.mxu0 0.0
  %1028 = vmatpush1.msra.mxu0 %v25
  %1029 = vmatprep.subr.mxu0 0.0
  %1030 = vmatpush2.msra.mxu0 0.0
  %1031 = vmatprep.subr.mxu0 0.0
  %1032 = vmatpush2.msra.mxu0 0.0
  %1033 = vmatprep.subr.mxu0 0.0
  %1034 = vmatpush2.msra.mxu0 0.0
  %1035 = vmatprep.subr.mxu0 0.0
  %1036 = vmatpush2.msra.mxu0 0.0
  %1037 = vmatprep.subr.mxu0 0.0
  %1038 = vmatpush2.msra.mxu0 0.0
  %1039 = vmatprep.subr.mxu0 0.0
  %1040 = vmatpush2.msra.mxu0 0.0
  %1041 = vmatprep.subr.mxu0 0.0
  %1042 = vmatpush2.msra.mxu0 0.0
  %1043 = vmatprep.subr.mxu0 0.0
  %1044 = vmatpush2.msra.mxu0 0.0
  %1045 = vmatprep.subr.mxu0 0.0
  %1046 = vmatpush2.msra.mxu0 0.0
  %1047 = vmatprep.subr.mxu0 0.0
  %1048 = vmatpush2.msra.mxu0 0.0
  %1049 = vmatprep.subr.mxu0 0.0
  %1050 = vmatpush2.msra.mxu0 0.0
  %1051 = vmatprep.subr.mxu0 0.0
  %1052 = vmatpush2.msra.mxu0 0.0
  %1053 = vmatprep.subr.mxu0 0.0
  %1054 = vmatpush2.msra.mxu0 0.0
  %1055 = vmatprep.subr.mxu0 0.0
  %1056 = vmatpush2.msra.mxu0 0.0
  %1057 = vmatprep.subr.mxu0 0.0
  %1058 = vmatpush2.msra.mxu0 0.0
  %1059 = vmatprep.subr.mxu0 0.0
  %1060 = vmatpush2.msra.mxu0 0.0
  %1061 = vmatprep.mubr.f32.mxu0 0.0
  %1062 = vmatmul.mubr.f32.gmra.mxu0 %v919
  %v1063 = vpop.f32.mrf.mxu0
  %v1064 = vadd.f32 0.0, %v1063
  %v1065 = vpop.f32.mrf.mxu0
  %1066 = vdwg.mxu0
  %v1067 = vadd.f32 %v923, %v993
  %v1068 = vxor.u32 %v1067, 2147483648
  %v1069 = vmul.f32 %v1068, 1.442695
  %v1070 = vpow.pop %v1069
  %v1071 = vadd.f32 %v1070, 1.0
  %v1072 = vrcp.pop %v1071
  %v1073 = vmul.f32 1.0, %v1072
  %v1074 = vadd.f32 %v924, %v995
  %v1075 = vxor.u32 %v1074, 2147483648
  %v1076 = vmul.f32 %v1075, 1.442695
  %v1077 = vpow.pop %v1076
  %v1078 = vadd.f32 %v1077, 1.0
  %v1079 = vrcp.pop %v1078
  %v1080 = vmul.f32 1.0, %v1079
  %v1081 = vadd.f32 %v1064, %v76
  %v1082 = vmul.f32 %v1073, %v1081
  %v1083 = vadd.f32 %v925, %v1082
  %v1084 = vtanh.pop %v1083
  %v1085 = vsub.f32 1.0, %v1080
  %v1086 = vmul.f32 %v1085, %v1084
  %v1087 = vmul.f32 %v1080, %v919
  %v1088 = vadd.f32 %v1086, %v1087
  %s1089 = scalar_lea.vmem %s4, 40
  %1090 = vst [vmem:[%s1089] sm:$0xff] %v1088
  %s1091 = scalar_lea.vmem %s0, 144
  %v1092 = vld [vmem:[%s1091] sm:$0xff]
  %v1093 = vld [vmem:[%s1091 + $0x8] sm:$0xff]
  %v1094 = vld [vmem:[%s1091 + $0x10] sm:$0xff]
  %1095 = vmatprep.subr.mxu0 %v69
  %1096 = vmatpush1.msra.mxu0 %v68
  %1097 = vmatprep.subr.mxu0 %v66
  %1098 = vmatpush1.msra.mxu0 %v65
  %1099 = vmatprep.subr.mxu0 %v63
  %1100 = vmatpush1.msra.mxu0 %v62
  %1101 = vmatprep.subr.mxu0 %v60
  %1102 = vmatpush1.msra.mxu0 %v59
  %1103 = vmatprep.subr.mxu0 %v57
  %1104 = vmatpush1.msra.mxu0 %v56
  %1105 = vmatprep.subr.mxu0 %v54
  %1106 = vmatpush1.msra.mxu0 %v53
  %1107 = vmatprep.subr.mxu0 %v51
  %1108 = vmatpush1.msra.mxu0 %v50
  %1109 = vmatprep.subr.mxu0 %v48
  %1110 = vmatpush1.msra.mxu0 %v47
  %1111 = vmatprep.subr.mxu0 %v45
  %1112 = vmatpush1.msra.mxu0 %v44
  %1113 = vmatprep.subr.mxu0 %v42
  %1114 = vmatpush1.msra.mxu0 %v41
  %1115 = vmatprep.subr.mxu0 %v39
  %1116 = vmatpush1.msra.mxu0 %v38
  %1117 = vmatprep.subr.mxu0 %v36
  %1118 = vmatpush1.msra.mxu0 %v35
  %1119 = vmatprep.subr.mxu0 %v33
  %1120 = vmatpush1.msra.mxu0 %v32
  %1121 = vmatprep.subr.mxu0 %v30
  %1122 = vmatpush1.msra.mxu0 %v29
  %1123 = vmatprep.subr.mxu0 %v27
  %1124 = vmatpush1.msra.mxu0 %v26
  %1125 = vmatprep.subr.mxu0 %v24
  %1126 = vmatpush1.msra.mxu0 %v23
  %1127 = vmatprep.subr.mxu0 0.0
  %1128 = vmatpush2.msra.mxu0 0.0
  %1129 = vmatprep.subr.mxu0 0.0
  %1130 = vmatpush2.msra.mxu0 0.0
  %1131 = vmatprep.subr.mxu0 0.0
  %1132 = vmatpush2.msra.mxu0 0.0
  %1133 = vmatprep.subr.mxu0 0.0
  %1134 = vmatpush2.msra.mxu0 0.0
  %1135 = vmatprep.subr.mxu0 0.0
  %1136 = vmatpush2.msra.mxu0 0.0
  %1137 = vmatprep.subr.mxu0 0.0
  %1138 = vmatpush2.msra.mxu0 0.0
  %1139 = vmatprep.subr.mxu0 0.0
  %1140 = vmatpush2.msra.mxu0 0.0
  %1141 = vmatprep.subr.mxu0 0.0
  %1142 = vmatpush2.msra.mxu0 0.0
  %1143 = vmatprep.subr.mxu0 0.0
  %1144 = vmatpush2.msra.mxu0 0.0
  %1145 = vmatprep.subr.mxu0 0.0
  %1146 = vmatpush2.msra.mxu0 0.0
  %1147 = vmatprep.subr.mxu0 0.0
  %1148 = vmatpush2.msra.mxu0 0.0
  %1149 = vmatprep.subr.mxu0 0.0
  %1150 = vmatpush2.msra.mxu0 0.0
  %1151 = vmatprep.subr.mxu0 0.0
  %1152 = vmatpush2.msra.mxu0 0.0
  %1153 = vmatprep.subr.mxu0 0.0
  %1154 = vmatpush2.msra.mxu0 0.0
  %1155 = vmatprep.subr.mxu0 0.0
  %1156 = vmatpush2.msra.mxu0 0.0
  %1157 = vmatprep.subr.mxu0 0.0
  %1158 = vmatpush2.msra.mxu0 0.0
  %1159 = vmatprep.mubr.f32.mxu0 0.0
  %1160 = vmatmul.mubr.f32.gmra.mxu0 %v1088
  %v1161 = vpop.f32.mrf.mxu0
  %v1162 = vadd.f32 0.0, %v1161
  %v1163 = vpop.f32.mrf.mxu0
  %v1164 = vadd.f32 0.0, %v1163
  %1165 = vdwg.mxu0
  %1166 = vmatprep.subr.mxu0 0.0
  %1167 = vmatpush1.msra.mxu0 %v70
  %1168 = vmatprep.subr.mxu0 0.0
  %1169 = vmatpush1.msra.mxu0 %v67
  %1170 = vmatprep.subr.mxu0 0.0
  %1171 = vmatpush1.msra.mxu0 %v64
  %1172 = vmatprep.subr.mxu0 0.0
  %1173 = vmatpush1.msra.mxu0 %v61
  %1174 = vmatprep.subr.mxu0 0.0
  %1175 = vmatpush1.msra.mxu0 %v58
  %1176 = vmatprep.subr.mxu0 0.0
  %1177 = vmatpush1.msra.mxu0 %v55
  %1178 = vmatprep.subr.mxu0 0.0
  %1179 = vmatpush1.msra.mxu0 %v52
  %1180 = vmatprep.subr.mxu0 0.0
  %1181 = vmatpush1.msra.mxu0 %v49
  %1182 = vmatprep.subr.mxu0 0.0
  %1183 = vmatpush1.msra.mxu0 %v46
  %1184 = vmatprep.subr.mxu0 0.0
  %1185 = vmatpush1.msra.mxu0 %v43
  %1186 = vmatprep.subr.mxu0 0.0
  %1187 = vmatpush1.msra.mxu0 %v40
  %1188 = vmatprep.subr.mxu0 0.0
  %1189 = vmatpush1.msra.mxu0 %v37
  %1190 = vmatprep.subr.mxu0 0.0
  %1191 = vmatpush1.msra.mxu0 %v34
  %1192 = vmatprep.subr.mxu0 0.0
  %1193 = vmatpush1.msra.mxu0 %v31
  %1194 = vmatprep.subr.mxu0 0.0
  %1195 = vmatpush1.msra.mxu0 %v28
  %1196 = vmatprep.subr.mxu0 0.0
  %1197 = vmatpush1.msra.mxu0 %v25
  %1198 = vmatprep.subr.mxu0 0.0
  %1199 = vmatpush2.msra.mxu0 0.0
  %1200 = vmatprep.subr.mxu0 0.0
  %1201 = vmatpush2.msra.mxu0 0.0
  %1202 = vmatprep.subr.mxu0 0.0
  %1203 = vmatpush2.msra.mxu0 0.0
  %1204 = vmatprep.subr.mxu0 0.0
  %1205 = vmatpush2.msra.mxu0 0.0
  %1206 = vmatprep.subr.mxu0 0.0
  %1207 = vmatpush2.msra.mxu0 0.0
  %1208 = vmatprep.subr.mxu0 0.0
  %1209 = vmatpush2.msra.mxu0 0.0
  %1210 = vmatprep.subr.mxu0 0.0
  %1211 = vmatpush2.msra.mxu0 0.0
  %1212 = vmatprep.subr.mxu0 0.0
  %1213 = vmatpush2.msra.mxu0 0.0
  %1214 = vmatprep.subr.mxu0 0.0
  %1215 = vmatpush2.msra.mxu0 0.0
  %1216 = vmatprep.subr.mxu0 0.0
  %1217 = vmatpush2.msra.mxu0 0.0
  %1218 = vmatprep.subr.mxu0 0.0
  %1219 = vmatpush2.msra.mxu0 0.0
  %1220 = vmatprep.subr.mxu0 0.0
  %1221 = vmatpush2.msra.mxu0 0.0
  %1222 = vmatprep.subr.mxu0 0.0
  %1223 = vmatpush2.msra.mxu0 0.0
  %1224 = vmatprep.subr.mxu0 0.0
  %1225 = vmatpush2.msra.mxu0 0.0
  %1226 = vmatprep.subr.mxu0 0.0
  %1227 = vmatpush2.msra.mxu0 0.0
  %1228 = vmatprep.subr.mxu0 0.0
  %1229 = vmatpush2.msra.mxu0 0.0
  %1230 = vmatprep.mubr.f32.mxu0 0.0
  %1231 = vmatmul.mubr.f32.gmra.mxu0 %v1088
  %v1232 = vpop.f32.mrf.mxu0
  %v1233 = vadd.f32 0.0, %v1232
  %v1234 = vpop.f32.mrf.mxu0
  %1235 = vdwg.mxu0
  %v1236 = vadd.f32 %v1092, %v1162
  %v1237 = vxor.u32 %v1236, 2147483648
  %v1238 = vmul.f32 %v1237, 1.442695
  %v1239 = vpow.pop %v1238
  %v1240 = vadd.f32 %v1239, 1.0
  %v1241 = vrcp.pop %v1240
  %v1242 = vmul.f32 1.0, %v1241
  %v1243 = vadd.f32 %v1093, %v1164
  %v1244 = vxor.u32 %v1243, 2147483648
  %v1245 = vmul.f32 %v1244, 1.442695
  %v1246 = vpow.pop %v1245
  %v1247 = vadd.f32 %v1246, 1.0
  %v1248 = vrcp.pop %v1247
  %v1249 = vmul.f32 1.0, %v1248
  %v1250 = vadd.f32 %v1233, %v76
  %v1251 = vmul.f32 %v1242, %v1250
  %v1252 = vadd.f32 %v1094, %v1251
  %v1253 = vtanh.pop %v1252
  %v1254 = vsub.f32 1.0, %v1249
  %v1255 = vmul.f32 %v1254, %v1253
  %v1256 = vmul.f32 %v1249, %v1088
  %v1257 = vadd.f32 %v1255, %v1256
  %s1258 = scalar_lea.vmem %s4, 48
  %1259 = vst [vmem:[%s1258] sm:$0xff] %v1257
  %s1260 = scalar_lea.vmem %s0, 168
  %v1261 = vld [vmem:[%s1260] sm:$0xff]
  %v1262 = vld [vmem:[%s1260 + $0x8] sm:$0xff]
  %v1263 = vld [vmem:[%s1260 + $0x10] sm:$0xff]
  %1264 = vmatprep.subr.mxu0 %v69
  %1265 = vmatpush1.msra.mxu0 %v68
  %1266 = vmatprep.subr.mxu0 %v66
  %1267 = vmatpush1.msra.mxu0 %v65
  %1268 = vmatprep.subr.mxu0 %v63
  %1269 = vmatpush1.msra.mxu0 %v62
  %1270 = vmatprep.subr.mxu0 %v60
  %1271 = vmatpush1.msra.mxu0 %v59
  %1272 = vmatprep.subr.mxu0 %v57
  %1273 = vmatpush1.msra.mxu0 %v56
  %1274 = vmatprep.subr.mxu0 %v54
  %1275 = vmatpush1.msra.mxu0 %v53
  %1276 = vmatprep.subr.mxu0 %v51
  %1277 = vmatpush1.msra.mxu0 %v50
  %1278 = vmatprep.subr.mxu0 %v48
  %1279 = vmatpush1.msra.mxu0 %v47
  %1280 = vmatprep.subr.mxu0 %v45
  %1281 = vmatpush1.msra.mxu0 %v44
  %1282 = vmatprep.subr.mxu0 %v42
  %1283 = vmatpush1.msra.mxu0 %v41
  %1284 = vmatprep.subr.mxu0 %v39
  %1285 = vmatpush1.msra.mxu0 %v38
  %1286 = vmatprep.subr.mxu0 %v36
  %1287 = vmatpush1.msra.mxu0 %v35
  %1288 = vmatprep.subr.mxu0 %v33
  %1289 = vmatpush1.msra.mxu0 %v32
  %1290 = vmatprep.subr.mxu0 %v30
  %1291 = vmatpush1.msra.mxu0 %v29
  %1292 = vmatprep.subr.mxu0 %v27
  %1293 = vmatpush1.msra.mxu0 %v26
  %1294 = vmatprep.subr.mxu0 %v24
  %1295 = vmatpush1.msra.mxu0 %v23
  %1296 = vmatprep.subr.mxu0 0.0
  %1297 = vmatpush2.msra.mxu0 0.0
  %1298 = vmatprep.subr.mxu0 0.0
  %1299 = vmatpush2.msra.mxu0 0.0
  %1300 = vmatprep.subr.mxu0 0.0
  %1301 = vmatpush2.msra.mxu0 0.0
  %1302 = vmatprep.subr.mxu0 0.0
  %1303 = vmatpush2.msra.mxu0 0.0
  %1304 = vmatprep.subr.mxu0 0.0
  %1305 = vmatpush2.msra.mxu0 0.0
  %1306 = vmatprep.subr.mxu0 0.0
  %1307 = vmatpush2.msra.mxu0 0.0
  %1308 = vmatprep.subr.mxu0 0.0
  %1309 = vmatpush2.msra.mxu0 0.0
  %1310 = vmatprep.subr.mxu0 0.0
  %1311 = vmatpush2.msra.mxu0 0.0
  %1312 = vmatprep.subr.mxu0 0.0
  %1313 = vmatpush2.msra.mxu0 0.0
  %1314 = vmatprep.subr.mxu0 0.0
  %1315 = vmatpush2.msra.mxu0 0.0
  %1316 = vmatprep.subr.mxu0 0.0
  %1317 = vmatpush2.msra.mxu0 0.0
  %1318 = vmatprep.subr.mxu0 0.0
  %1319 = vmatpush2.msra.mxu0 0.0
  %1320 = vmatprep.subr.mxu0 0.0
  %1321 = vmatpush2.msra.mxu0 0.0
  %1322 = vmatprep.subr.mxu0 0.0
  %1323 = vmatpush2.msra.mxu0 0.0
  %1324 = vmatprep.subr.mxu0 0.0
  %1325 = vmatpush2.msra.mxu0 0.0
  %1326 = vmatprep.subr.mxu0 0.0
  %1327 = vmatpush2.msra.mxu0 0.0
  %1328 = vmatprep.mubr.f32.mxu0 0.0
  %1329 = vmatmul.mubr.f32.gmra.mxu0 %v1257
  %v1330 = vpop.f32.mrf.mxu0
  %v1331 = vadd.f32 0.0, %v1330
  %v1332 = vpop.f32.mrf.mxu0
  %v1333 = vadd.f32 0.0, %v1332
  %1334 = vdwg.mxu0
  %1335 = vmatprep.subr.mxu0 0.0
  %1336 = vmatpush1.msra.mxu0 %v70
  %1337 = vmatprep.subr.mxu0 0.0
  %1338 = vmatpush1.msra.mxu0 %v67
  %1339 = vmatprep.subr.mxu0 0.0
  %1340 = vmatpush1.msra.mxu0 %v64
  %1341 = vmatprep.subr.mxu0 0.0
  %1342 = vmatpush1.msra.mxu0 %v61
  %1343 = vmatprep.subr.mxu0 0.0
  %1344 = vmatpush1.msra.mxu0 %v58
  %1345 = vmatprep.subr.mxu0 0.0
  %1346 = vmatpush1.msra.mxu0 %v55
  %1347 = vmatprep.subr.mxu0 0.0
  %1348 = vmatpush1.msra.mxu0 %v52
  %1349 = vmatprep.subr.mxu0 0.0
  %1350 = vmatpush1.msra.mxu0 %v49
  %1351 = vmatprep.subr.mxu0 0.0
  %1352 = vmatpush1.msra.mxu0 %v46
  %1353 = vmatprep.subr.mxu0 0.0
  %1354 = vmatpush1.msra.mxu0 %v43
  %1355 = vmatprep.subr.mxu0 0.0
  %1356 = vmatpush1.msra.mxu0 %v40
  %1357 = vmatprep.subr.mxu0 0.0
  %1358 = vmatpush1.msra.mxu0 %v37
  %1359 = vmatprep.subr.mxu0 0.0
  %1360 = vmatpush1.msra.mxu0 %v34
  %1361 = vmatprep.subr.mxu0 0.0
  %1362 = vmatpush1.msra.mxu0 %v31
  %1363 = vmatprep.subr.mxu0 0.0
  %1364 = vmatpush1.msra.mxu0 %v28
  %1365 = vmatprep.subr.mxu0 0.0
  %1366 = vmatpush1.msra.mxu0 %v25
  %1367 = vmatprep.subr.mxu0 0.0
  %1368 = vmatpush2.msra.mxu0 0.0
  %1369 = vmatprep.subr.mxu0 0.0
  %1370 = vmatpush2.msra.mxu0 0.0
  %1371 = vmatprep.subr.mxu0 0.0
  %1372 = vmatpush2.msra.mxu0 0.0
  %1373 = vmatprep.subr.mxu0 0.0
  %1374 = vmatpush2.msra.mxu0 0.0
  %1375 = vmatprep.subr.mxu0 0.0
  %1376 = vmatpush2.msra.mxu0 0.0
  %1377 = vmatprep.subr.mxu0 0.0
  %1378 = vmatpush2.msra.mxu0 0.0
  %1379 = vmatprep.subr.mxu0 0.0
  %1380 = vmatpush2.msra.mxu0 0.0
  %1381 = vmatprep.subr.mxu0 0.0
  %1382 = vmatpush2.msra.mxu0 0.0
  %1383 = vmatprep.subr.mxu0 0.0
  %1384 = vmatpush2.msra.mxu0 0.0
  %1385 = vmatprep.subr.mxu0 0.0
  %1386 = vmatpush2.msra.mxu0 0.0
  %1387 = vmatprep.subr.mxu0 0.0
  %1388 = vmatpush2.msra.mxu0 0.0
  %1389 = vmatprep.subr.mxu0 0.0
  %1390 = vmatpush2.msra.mxu0 0.0
  %1391 = vmatprep.subr.mxu0 0.0
  %1392 = vmatpush2.msra.mxu0 0.0
  %1393 = vmatprep.subr.mxu0 0.0
  %1394 = vmatpush2.msra.mxu0 0.0
  %1395 = vmatprep.subr.mxu0 0.0
  %1396 = vmatpush2.msra.mxu0 0.0
  %1397 = vmatprep.subr.mxu0 0.0
  %1398 = vmatpush2.msra.mxu0 0.0
  %1399 = vmatprep.mubr.f32.mxu0 0.0
  %1400 = vmatmul.mubr.f32.gmra.mxu0 %v1257
  %v1401 = vpop.f32.mrf.mxu0
  %v1402 = vadd.f32 0.0, %v1401
  %v1403 = vpop.f32.mrf.mxu0
  %1404 = vdwg.mxu0
  %v1405 = vadd.f32 %v1261, %v1331
  %v1406 = vxor.u32 %v1405, 2147483648
  %v1407 = vmul.f32 %v1406, 1.442695
  %v1408 = vpow.pop %v1407
  %v1409 = vadd.f32 %v1408, 1.0
  %v1410 = vrcp.pop %v1409
  %v1411 = vmul.f32 1.0, %v1410
  %v1412 = vadd.f32 %v1262, %v1333
  %v1413 = vxor.u32 %v1412, 2147483648
  %v1414 = vmul.f32 %v1413, 1.442695
  %v1415 = vpow.pop %v1414
  %v1416 = vadd.f32 %v1415, 1.0
  %v1417 = vrcp.pop %v1416
  %v1418 = vmul.f32 1.0, %v1417
  %v1419 = vadd.f32 %v1402, %v76
  %v1420 = vmul.f32 %v1411, %v1419
  %v1421 = vadd.f32 %v1263, %v1420
  %v1422 = vtanh.pop %v1421
  %v1423 = vsub.f32 1.0, %v1418
  %v1424 = vmul.f32 %v1423, %v1422
  %v1425 = vmul.f32 %v1418, %v1257
  %v1426 = vadd.f32 %v1424, %v1425
  %s1427 = scalar_lea.vmem %s4, 56
  %1428 = vst [vmem:[%s1427] sm:$0xff] %v1426
  %1429 = vst [vmem:[#allocation2] sm:$0xff] %v1426
  // Predicated region
  $region22: #{my_gru_pallas.3} parent=0 // pred_check
    _
  $region23: #{my_gru_pallas.3} parent=0 // pred_check_branch
    %1431 = sbr.rel (0) target = $region25
  $region24: #{my_gru_pallas.3} parent=0 // pred_region
    _
  $region25: #{my_gru_pallas.3} parent=0 // pred_fallthru
    _
  // Predicated region
  $region26: #{my_gru_pallas.3} parent=0 // pred_check
    _
  $region27: #{my_gru_pallas.3} parent=0 // pred_check_branch
    %1433 = sbr.rel (0) target = $region29
  $region28: #{my_gru_pallas.3} parent=0 // pred_region
    _
  $region29: #{my_gru_pallas.3} parent=0 // pred_fallthru
    _

</llo_original>
